<compile_context>
chip_gen: v7x
topology: tpu7x:2x2x1
jax: 0.10.0
libtpu: 0.0.40
codegen_flags: <defaults>
</compile_context>

<pallas_src>
import functools

import jax
import jax.numpy as jnp
import numpy as np
from jax import lax
from jax.experimental import pallas as pl
from jax.experimental.pallas import tpu as pltpu


def _upsample_kernel(x_ref, wp_ref, o_ref, xs_ref, y3_ref, *, H, W, Cin, Cout):
    """Fused 3x3 same-conv (bias-free) + PixelShuffle(2) for one batch element.

    x_ref:  (1, Cin, H*W)   NCHW input, spatial flattened onto lanes
    wp_ref: (Cout, 9*Cin)   conv weight; rows permuted s-major (s = 2i+j of the
                            pixel shuffle), columns (dy*3+dx)*Cin + ci
    o_ref:  (1, Co, H, 4W)  output; lane index = i*2W + 2w + j
                            (free reshape to (Co, 2H, 2W) outside)
    xs_ref: (9*Cin, H*W)    VMEM im2col scratch (read window starts at lane 0)
    y3_ref: (Cout, H, W)    VMEM conv result with rows un-flattened to sublanes
    """
    HW = H * W
    Co = Cout // 4

    x = x_ref[0].astype(jnp.float32)                       # (Cin, HW)

    # Column-position masks built in-kernel (iota + compare: free VPU work).
    q = lax.broadcasted_iota(jnp.int32, (1, HW), 1)
    wpos = q % W
    x_dx0 = jnp.where(wpos != W - 1, x, 0.0)               # taps with dx == 0
    x_dx2 = jnp.where(wpos != 0, x, 0.0)                   # taps with dx == 2

    # ---- im2col: 9 shifted copies of x, clipped to the read window ----------
    # The read window is [0, HW) (128-aligned start); per tap only the few
    # uncovered edge lanes (top / bottom padding rows) are zeroed.
    for dy in range(3):
        for dx in range(3):
            t = dy * 3 + dx
            s = (dy - 1) * W + (dx - 1)                    # flat spatial shift
            src = x_dx0 if dx == 0 else (x_dx2 if dx == 2 else x)
            q0 = max(0, -s)
            q1 = HW - max(0, s)
            xs_ref[t * Cin:(t + 1) * Cin, q0:q1] = src[:, q0 + s:q1 + s]
            if q0 > 0:      # top-padding rows (dy == 0 taps)
                xs_ref[t * Cin:(t + 1) * Cin, 0:q0] = jnp.zeros((Cin, q0),
                                                                jnp.float32)
            if q1 < HW:     # bottom-padding rows (dy == 2 taps)
                xs_ref[t * Cin:(t + 1) * Cin, q1:HW] = jnp.zeros((Cin, HW - q1),
                                                                 jnp.float32)

    # ---- single K = 9*Cin contraction on the MXU (f32 accumulation) ---------
    y = jnp.dot(wp_ref[...], xs_ref[...],
                preferred_element_type=jnp.float32)        # (Cout, HW), s-major rows

    # ---- un-flatten spatial: lanes -> (rows on sublanes) x lanes ------------
    # TODO(synk): the one remaining relayout; fold into the final store once a
    # lane-splitting reshape / strided store is verified on this Mosaic version.
    for h in range(H):
        y3_ref[:, h, :] = y[:, h * W:(h + 1) * W]

    # ---- fused PixelShuffle(2) ----------------------------------------------
    # Weight rows are s-major, so each shuffle plane is a contiguous sublane
    # slice.  Lane interleave (j parity) via two tiny in-kernel (W, 2W) 0/1
    # spread matrices; row parity (i) via two dense lane-slice stores.
    r = lax.broadcasted_iota(jnp.int32, (W, 2 * W), 0)
    c = lax.broadcasted_iota(jnp.int32, (W, 2 * W), 1)
    s0 = (c == 2 * r).astype(jnp.float32)                  # w -> 2w      (j = 0)
    s1 = (c == 2 * r + 1).astype(jnp.float32)              # w -> 2w + 1  (j = 1)
    for i in range(2):                                     # output-row parity
        a = y3_ref[(2 * i) * Co:(2 * i + 1) * Co]          # conv ch 4c+2i   (Co,H,W)
        b = y3_ref[(2 * i + 1) * Co:(2 * i + 2) * Co]      # conv ch 4c+2i+1 (Co,H,W)
        row = (jnp.dot(a.reshape(Co * H, W), s0, preferred_element_type=jnp.float32)
               + jnp.dot(b.reshape(Co * H, W), s1, preferred_element_type=jnp.float32))
        o_ref[0, :, :, i * 2 * W:(i + 1) * 2 * W] = (
            row.reshape(Co, H, 2 * W).astype(o_ref.dtype))


def upsample_forward(x_nchw, w_oihw):
    """Equivalent of Upsample(n_feat).forward(x); x NCHW, w OIHW = (2n, n, 3, 3)."""
    B, Cin, H, W = x_nchw.shape
    Cout = w_oihw.shape[0]
    assert Cout == 2 * Cin and Cout % 4 == 0, (Cout, Cin)
    Co = Cout // 4
    HW = H * W

    # OIHW -> (Cout, 9*Cin) with column (dy*3+dx)*Cin + ci, rows permuted to
    # pixel-shuffle s-major order (row s*Co + c <- conv channel 4c + s).
    wt = jnp.transpose(w_oihw, (2, 3, 1, 0)).reshape(9 * Cin, Cout).T
    perm = np.arange(Cout).reshape(Co, 4).T.reshape(-1)
    wp = wt[perm].astype(jnp.float32)

    x_flat = x_nchw.reshape(B, Cin, HW)                    # free reshape

    itemsize = 4
    step_bytes = (2 * Cin * HW + 2 * Cout * HW + 2 * Cout * 9 * Cin
                  + 9 * Cin * HW + Cout * HW) * itemsize
    vmem_limit = int(min(96 * 2 ** 20, max(32 * 2 ** 20, 4 * step_bytes)))

    kernel = functools.partial(_upsample_kernel, H=H, W=W, Cin=Cin, Cout=Cout)
    out = pl.pallas_call(
        kernel,
        out_shape=jax.ShapeDtypeStruct((B, Co, H, 4 * W), x_nchw.dtype),
        grid_spec=pltpu.PrefetchScalarGridSpec(
            num_scalar_prefetch=0,
            grid=(B,),
            in_specs=[
                pl.BlockSpec((1, Cin, HW), lambda b: (b, 0, 0)),
                pl.BlockSpec((Cout, 9 * Cin), lambda b: (0, 0)),
            ],
            out_specs=pl.BlockSpec((1, Co, H, 4 * W), lambda b: (b, 0, 0, 0)),
            scratch_shapes=[
                pltpu.VMEM((9 * Cin, HW), jnp.float32),
                pltpu.VMEM((Cout, H, W), jnp.float32),
            ],
        ),
        compiler_params=pltpu.CompilerParams(
            dimension_semantics=("parallel",),
            vmem_limit_bytes=vmem_limit,
        ),
    )(x_flat, wp)

    # Free (contiguity-preserving) reshape: (B, Co, H, 4W) -> (B, Co, 2H, 2W).
    return out.reshape(B, Co, 2 * H, 2 * W)


def upsample_reference(x_nchw, w_oihw):
    """Pure-JAX reference mirroring the PyTorch module (for correctness check)."""
    y = jax.lax.conv_general_dilated(
        x_nchw, w_oihw, window_strides=(1, 1), padding=((1, 1), (1, 1)),
        dimension_numbers=('NCHW', 'OIHW', 'NCHW'))
    B, C2, H, W = y.shape
    r = 2
    y = y.reshape(B, C2 // (r * r), r, r, H, W)
    y = jnp.transpose(y, (0, 1, 4, 2, 5, 3))
    return y.reshape(B, C2 // (r * r), H * r, W * r)


if __name__ == "__main__":
    key = jax.random.PRNGKey(0)
    kx, kw = jax.random.split(key)

    B, n_feat, H, W = 2, 4, 16, 16
    x = jax.random.normal(kx, (B, n_feat, H, W), dtype=jnp.float32)

    # Deterministic synthetic Conv2d weight, OIHW = (2*n_feat, n_feat, 3, 3), bias=False.
    fan_in = n_feat * 3 * 3
    w = jax.random.uniform(kw, (2 * n_feat, n_feat, 3, 3), dtype=jnp.float32,
                           minval=-1.0, maxval=1.0) / np.sqrt(fan_in)

    out = jax.block_until_ready(upsample_forward(x, w))

    ref = jax.block_until_ready(upsample_reference(x, w))
    assert out.shape == (B, n_feat // 2, 2 * H, 2 * W), out.shape
    np.testing.assert_allclose(np.asarray(out), np.asarray(ref),
                               rtol=1e-4, atol=1e-4)

    print("KERNEL_OK")
</pallas_src>

<mosaic_0001>
module attributes {stable_mosaic.version = 11 : i64} {
  func.func @_upsample_kernel(%arg0: i32, %arg1: memref<1x4x256xf32, #tpu.memory_space<vmem>>, %arg2: memref<8x36xf32, #tpu.memory_space<vmem>>, %arg3: memref<1x2x16x64xf32, #tpu.memory_space<vmem>>, %arg4: memref<36x256xf32, #tpu.memory_space<vmem>>, %arg5: memref<8x16x16xf32, #tpu.memory_space<vmem>>) attributes {dimension_semantics = [#tpu.dimension_semantics<parallel>], iteration_bounds = array<i64: 2>, scalar_prefetch = 0 : i64, scratch_operands = 2 : i64, tpu.core_type = #tpu.core_type<tc>, window_params = [{transform_indices = @transform_0, window_bounds = array<i64: 1, 4, 256>}, {pipeline_mode = #tpu.pipeline_mode<synchronous>, transform_indices = @transform_1, window_bounds = array<i64: 8, 36>}, {transform_indices = @transform_2, window_bounds = array<i64: 1, 2, 16, 64>}]} {
    %c0 = arith.constant 0 : index
    %c0_0 = arith.constant 0 : index
    %c0_1 = arith.constant 0 : index
    %0 = vector.load %arg1[%c0, %c0_0, %c0_1] : memref<1x4x256xf32, #tpu.memory_space<vmem>>, vector<1x4x256xf32>
    %1 = vector.shape_cast %0 : vector<1x4x256xf32> to vector<4x256xf32>
    %2 = tpu.iota {dimensions = array<i32: 1>} : vector<1x256xi32>
    %c16_i32 = arith.constant 16 : i32
    %c0_i32 = arith.constant 0 : i32
    %3 = arith.cmpi eq, %c16_i32, %c0_i32 : i32
    %c1_i32 = arith.constant 1 : i32
    %4 = arith.select %3, %c1_i32, %c16_i32 : i32
    %5 = vector.broadcast %4 : i32 to vector<1x256xi32>
    %6 = arith.remsi %2, %5 : vector<1x256xi32>
    %c0_i32_2 = arith.constant 0 : i32
    %7 = vector.broadcast %c0_i32_2 : i32 to vector<1x256xi32>
    %8 = arith.cmpi ne, %6, %7 : vector<1x256xi32>
    %c0_i32_3 = arith.constant 0 : i32
    %9 = vector.broadcast %c0_i32_3 : i32 to vector<1x256xi32>
    %10 = arith.cmpi slt, %6, %9 : vector<1x256xi32>
    %c0_i32_4 = arith.constant 0 : i32
    %11 = arith.cmpi slt, %4, %c0_i32_4 : i32
    %12 = vector.broadcast %11 : i1 to vector<1x256xi1>
    %13 = vector.broadcast %12 : vector<1x256xi1> to vector<1x256xi1>
    %14 = arith.xori %10, %13 : vector<1x256xi1>
    %15 = arith.andi %14, %8 : vector<1x256xi1>
    %16 = vector.broadcast %4 : i32 to vector<1x256xi32>
    %17 = arith.addi %6, %16 : vector<1x256xi32>
    %18 = arith.select %15, %17, %6 : vector<1x256xi1>, vector<1x256xi32>
    %c15_i32 = arith.constant 15 : i32
    %19 = vector.broadcast %c15_i32 : i32 to vector<1x256xi32>
    %20 = arith.cmpi ne, %18, %19 : vector<1x256xi32>
    %cst = arith.constant 0.000000e+00 : f32
    %21 = vector.shape_cast %20 : vector<1x256xi1> to vector<1x256xi1>
    %22 = vector.broadcast %21 : vector<1x256xi1> to vector<4x256xi1>
    %23 = vector.broadcast %cst : f32 to vector<4x256xf32>
    %24 = arith.select %22, %1, %23 : vector<4x256xi1>, vector<4x256xf32>
    %c0_i32_5 = arith.constant 0 : i32
    %25 = vector.broadcast %c0_i32_5 : i32 to vector<1x256xi32>
    %26 = arith.cmpi ne, %18, %25 : vector<1x256xi32>
    %cst_6 = arith.constant 0.000000e+00 : f32
    %27 = vector.shape_cast %26 : vector<1x256xi1> to vector<1x256xi1>
    %28 = vector.broadcast %27 : vector<1x256xi1> to vector<4x256xi1>
    %29 = vector.broadcast %cst_6 : f32 to vector<4x256xf32>
    %30 = arith.select %28, %1, %29 : vector<4x256xi1>, vector<4x256xf32>
    %31 = vector.extract_strided_slice %24 {offsets = [0, 0], sizes = [4, 239], strides = [1, 1]} : vector<4x256xf32> to vector<4x239xf32>
    %c0_7 = arith.constant 0 : index
    %c17 = arith.constant 17 : index
    %32 = vector.load %arg4[%c0_7, %c17] : memref<36x256xf32, #tpu.memory_space<vmem>>, vector<4x239xf32>
    tpu.vector_store %arg4[%c0_7, %c17], %31 {strides = array<i32>} : memref<36x256xf32, #tpu.memory_space<vmem>>, vector<4x239xf32>,
    %cst_8 = arith.constant 0.000000e+00 : f32
    %33 = vector.broadcast %cst_8 : f32 to vector<4x17xf32>
    %c0_9 = arith.constant 0 : index
    %c0_10 = arith.constant 0 : index
    %34 = vector.load %arg4[%c0_9, %c0_10] : memref<36x256xf32, #tpu.memory_space<vmem>>, vector<4x17xf32>
    tpu.vector_store %arg4[%c0_9, %c0_10], %33 {strides = array<i32>} : memref<36x256xf32, #tpu.memory_space<vmem>>, vector<4x17xf32>,
    %35 = vector.extract_strided_slice %1 {offsets = [0, 0], sizes = [4, 240], strides = [1, 1]} : vector<4x256xf32> to vector<4x240xf32>
    %c4 = arith.constant 4 : index
    %c16 = arith.constant 16 : index
    %36 = vector.load %arg4[%c4, %c16] : memref<36x256xf32, #tpu.memory_space<vmem>>, vector<4x240xf32>
    tpu.vector_store %arg4[%c4, %c16], %35 {strides = array<i32>} : memref<36x256xf32, #tpu.memory_space<vmem>>, vector<4x240xf32>,
    %cst_11 = arith.constant 0.000000e+00 : f32
    %37 = vector.broadcast %cst_11 : f32 to vector<4x16xf32>
    %c4_12 = arith.constant 4 : index
    %c0_13 = arith.constant 0 : index
    %38 = vector.load %arg4[%c4_12, %c0_13] : memref<36x256xf32, #tpu.memory_space<vmem>>, vector<4x16xf32>
    tpu.vector_store %arg4[%c4_12, %c0_13], %37 {strides = array<i32>} : memref<36x256xf32, #tpu.memory_space<vmem>>, vector<4x16xf32>,
    %39 = vector.extract_strided_slice %30 {offsets = [0, 0], sizes = [4, 241], strides = [1, 1]} : vector<4x256xf32> to vector<4x241xf32>
    %c8 = arith.constant 8 : index
    %c15 = arith.constant 15 : index
    %40 = vector.load %arg4[%c8, %c15] : memref<36x256xf32, #tpu.memory_space<vmem>>, vector<4x241xf32>
    tpu.vector_store %arg4[%c8, %c15], %39 {strides = array<i32>} : memref<36x256xf32, #tpu.memory_space<vmem>>, vector<4x241xf32>,
    %cst_14 = arith.constant 0.000000e+00 : f32
    %41 = vector.broadcast %cst_14 : f32 to vector<4x15xf32>
    %c8_15 = arith.constant 8 : index
    %c0_16 = arith.constant 0 : index
    %42 = vector.load %arg4[%c8_15, %c0_16] : memref<36x256xf32, #tpu.memory_space<vmem>>, vector<4x15xf32>
    tpu.vector_store %arg4[%c8_15, %c0_16], %41 {strides = array<i32>} : memref<36x256xf32, #tpu.memory_space<vmem>>, vector<4x15xf32>,
    %43 = vector.extract_strided_slice %24 {offsets = [0, 0], sizes = [4, 255], strides = [1, 1]} : vector<4x256xf32> to vector<4x255xf32>
    %c12 = arith.constant 12 : index
    %c1 = arith.constant 1 : index
    %44 = vector.load %arg4[%c12, %c1] : memref<36x256xf32, #tpu.memory_space<vmem>>, vector<4x255xf32>
    tpu.vector_store %arg4[%c12, %c1], %43 {strides = array<i32>} : memref<36x256xf32, #tpu.memory_space<vmem>>, vector<4x255xf32>,
    %cst_17 = arith.constant 0.000000e+00 : f32
    %45 = vector.broadcast %cst_17 : f32 to vector<4x1xf32>
    %c12_18 = arith.constant 12 : index
    %c0_19 = arith.constant 0 : index
    %46 = vector.load %arg4[%c12_18, %c0_19] : memref<36x256xf32, #tpu.memory_space<vmem>>, vector<4x1xf32>
    tpu.vector_store %arg4[%c12_18, %c0_19], %45 {strides = array<i32>} : memref<36x256xf32, #tpu.memory_space<vmem>>, vector<4x1xf32>,
    %c16_20 = arith.constant 16 : index
    %c0_21 = arith.constant 0 : index
    %47 = vector.load %arg4[%c16_20, %c0_21] : memref<36x256xf32, #tpu.memory_space<vmem>>, vector<4x256xf32>
    tpu.vector_store %arg4[%c16_20, %c0_21], %1 {strides = array<i32>} : memref<36x256xf32, #tpu.memory_space<vmem>>, vector<4x256xf32>,
    %48 = vector.extract_strided_slice %30 {offsets = [0, 1], sizes = [4, 255], strides = [1, 1]} : vector<4x256xf32> to vector<4x255xf32>
    %c20 = arith.constant 20 : index
    %c0_22 = arith.constant 0 : index
    %49 = vector.load %arg4[%c20, %c0_22] : memref<36x256xf32, #tpu.memory_space<vmem>>, vector<4x255xf32>
    tpu.vector_store %arg4[%c20, %c0_22], %48 {strides = array<i32>} : memref<36x256xf32, #tpu.memory_space<vmem>>, vector<4x255xf32>,
    %cst_23 = arith.constant 0.000000e+00 : f32
    %50 = vector.broadcast %cst_23 : f32 to vector<4x1xf32>
    %c20_24 = arith.constant 20 : index
    %c255 = arith.constant 255 : index
    %51 = vector.load %arg4[%c20_24, %c255] : memref<36x256xf32, #tpu.memory_space<vmem>>, vector<4x1xf32>
    tpu.vector_store %arg4[%c20_24, %c255], %50 {strides = array<i32>} : memref<36x256xf32, #tpu.memory_space<vmem>>, vector<4x1xf32>,
    %52 = vector.extract_strided_slice %24 {offsets = [0, 15], sizes = [4, 241], strides = [1, 1]} : vector<4x256xf32> to vector<4x241xf32>
    %c24 = arith.constant 24 : index
    %c0_25 = arith.constant 0 : index
    %53 = vector.load %arg4[%c24, %c0_25] : memref<36x256xf32, #tpu.memory_space<vmem>>, vector<4x241xf32>
    tpu.vector_store %arg4[%c24, %c0_25], %52 {strides = array<i32>} : memref<36x256xf32, #tpu.memory_space<vmem>>, vector<4x241xf32>,
    %cst_26 = arith.constant 0.000000e+00 : f32
    %54 = vector.broadcast %cst_26 : f32 to vector<4x15xf32>
    %c24_27 = arith.constant 24 : index
    %c241 = arith.constant 241 : index
    %55 = vector.load %arg4[%c24_27, %c241] : memref<36x256xf32, #tpu.memory_space<vmem>>, vector<4x15xf32>
    tpu.vector_store %arg4[%c24_27, %c241], %54 {strides = array<i32>} : memref<36x256xf32, #tpu.memory_space<vmem>>, vector<4x15xf32>,
    %56 = vector.extract_strided_slice %1 {offsets = [0, 16], sizes = [4, 240], strides = [1, 1]} : vector<4x256xf32> to vector<4x240xf32>
    %c28 = arith.constant 28 : index
    %c0_28 = arith.constant 0 : index
    %57 = vector.load %arg4[%c28, %c0_28] : memref<36x256xf32, #tpu.memory_space<vmem>>, vector<4x240xf32>
    tpu.vector_store %arg4[%c28, %c0_28], %56 {strides = array<i32>} : memref<36x256xf32, #tpu.memory_space<vmem>>, vector<4x240xf32>,
    %cst_29 = arith.constant 0.000000e+00 : f32
    %58 = vector.broadcast %cst_29 : f32 to vector<4x16xf32>
    %c28_30 = arith.constant 28 : index
    %c240 = arith.constant 240 : index
    %59 = vector.load %arg4[%c28_30, %c240] : memref<36x256xf32, #tpu.memory_space<vmem>>, vector<4x16xf32>
    tpu.vector_store %arg4[%c28_30, %c240], %58 {strides = array<i32>} : memref<36x256xf32, #tpu.memory_space<vmem>>, vector<4x16xf32>,
    %60 = vector.extract_strided_slice %30 {offsets = [0, 17], sizes = [4, 239], strides = [1, 1]} : vector<4x256xf32> to vector<4x239xf32>
    %c32 = arith.constant 32 : index
    %c0_31 = arith.constant 0 : index
    %61 = vector.load %arg4[%c32, %c0_31] : memref<36x256xf32, #tpu.memory_space<vmem>>, vector<4x239xf32>
    tpu.vector_store %arg4[%c32, %c0_31], %60 {strides = array<i32>} : memref<36x256xf32, #tpu.memory_space<vmem>>, vector<4x239xf32>,
    %cst_32 = arith.constant 0.000000e+00 : f32
    %62 = vector.broadcast %cst_32 : f32 to vector<4x17xf32>
    %c32_33 = arith.constant 32 : index
    %c239 = arith.constant 239 : index
    %63 = vector.load %arg4[%c32_33, %c239] : memref<36x256xf32, #tpu.memory_space<vmem>>, vector<4x17xf32>
    tpu.vector_store %arg4[%c32_33, %c239], %62 {strides = array<i32>} : memref<36x256xf32, #tpu.memory_space<vmem>>, vector<4x17xf32>,
    %c0_34 = arith.constant 0 : index
    %c0_35 = arith.constant 0 : index
    %64 = vector.load %arg2[%c0_34, %c0_35] : memref<8x36xf32, #tpu.memory_space<vmem>>, vector<8x36xf32>
    %c0_36 = arith.constant 0 : index
    %c0_37 = arith.constant 0 : index
    %65 = vector.load %arg4[%c0_36, %c0_37] : memref<36x256xf32, #tpu.memory_space<vmem>>, vector<36x256xf32>
    %cst_38 = arith.constant dense<0.000000e+00> : vector<8x256xf32>
    %66 = tpu.matmul %64, %65, %cst_38 {dimension_numbers = #tpu.dot_dimension_numbers<[1], [0], [0], [1], [0, 0, 1, 1], [], []>} : vector<8x36xf32>, vector<36x256xf32>, vector<8x256xf32> -> vector<8x256xf32>
    %67 = vector.extract_strided_slice %66 {offsets = [0, 0], sizes = [8, 16], strides = [1, 1]} : vector<8x256xf32> to vector<8x16xf32>
    %c0_39 = arith.constant 0 : index
    %c0_40 = arith.constant 0 : index
    %c0_41 = arith.constant 0 : index
    %68 = vector.load %arg5[%c0_39, %c0_40, %c0_41] : memref<8x16x16xf32, #tpu.memory_space<vmem>>, vector<8x1x16xf32>
    %69 = vector.shape_cast %68 : vector<8x1x16xf32> to vector<8x16xf32>
    %70 = vector.shape_cast %67 : vector<8x16xf32> to vector<8x1x16xf32>
    tpu.vector_store %arg5[%c0_39, %c0_40, %c0_41], %70 {strides = array<i32>} : memref<8x16x16xf32, #tpu.memory_space<vmem>>, vector<8x1x16xf32>,
    %71 = vector.extract_strided_slice %66 {offsets = [0, 16], sizes = [8, 16], strides = [1, 1]} : vector<8x256xf32> to vector<8x16xf32>
    %c0_42 = arith.constant 0 : index
    %c1_43 = arith.constant 1 : index
    %c0_44 = arith.constant 0 : index
    %72 = vector.load %arg5[%c0_42, %c1_43, %c0_44] : memref<8x16x16xf32, #tpu.memory_space<vmem>>, vector<8x1x16xf32>
    %73 = vector.shape_cast %72 : vector<8x1x16xf32> to vector<8x16xf32>
    %74 = vector.shape_cast %71 : vector<8x16xf32> to vector<8x1x16xf32>
    tpu.vector_store %arg5[%c0_42, %c1_43, %c0_44], %74 {strides = array<i32>} : memref<8x16x16xf32, #tpu.memory_space<vmem>>, vector<8x1x16xf32>,
    %75 = vector.extract_strided_slice %66 {offsets = [0, 32], sizes = [8, 16], strides = [1, 1]} : vector<8x256xf32> to vector<8x16xf32>
    %c0_45 = arith.constant 0 : index
    %c2 = arith.constant 2 : index
    %c0_46 = arith.constant 0 : index
    %76 = vector.load %arg5[%c0_45, %c2, %c0_46] : memref<8x16x16xf32, #tpu.memory_space<vmem>>, vector<8x1x16xf32>
    %77 = vector.shape_cast %76 : vector<8x1x16xf32> to vector<8x16xf32>
    %78 = vector.shape_cast %75 : vector<8x16xf32> to vector<8x1x16xf32>
    tpu.vector_store %arg5[%c0_45, %c2, %c0_46], %78 {strides = array<i32>} : memref<8x16x16xf32, #tpu.memory_space<vmem>>, vector<8x1x16xf32>,
    %79 = vector.extract_strided_slice %66 {offsets = [0, 48], sizes = [8, 16], strides = [1, 1]} : vector<8x256xf32> to vector<8x16xf32>
    %c0_47 = arith.constant 0 : index
    %c3 = arith.constant 3 : index
    %c0_48 = arith.constant 0 : index
    %80 = vector.load %arg5[%c0_47, %c3, %c0_48] : memref<8x16x16xf32, #tpu.memory_space<vmem>>, vector<8x1x16xf32>
    %81 = vector.shape_cast %80 : vector<8x1x16xf32> to vector<8x16xf32>
    %82 = vector.shape_cast %79 : vector<8x16xf32> to vector<8x1x16xf32>
    tpu.vector_store %arg5[%c0_47, %c3, %c0_48], %82 {strides = array<i32>} : memref<8x16x16xf32, #tpu.memory_space<vmem>>, vector<8x1x16xf32>,
    %83 = vector.extract_strided_slice %66 {offsets = [0, 64], sizes = [8, 16], strides = [1, 1]} : vector<8x256xf32> to vector<8x16xf32>
    %c0_49 = arith.constant 0 : index
    %c4_50 = arith.constant 4 : index
    %c0_51 = arith.constant 0 : index
    %84 = vector.load %arg5[%c0_49, %c4_50, %c0_51] : memref<8x16x16xf32, #tpu.memory_space<vmem>>, vector<8x1x16xf32>
    %85 = vector.shape_cast %84 : vector<8x1x16xf32> to vector<8x16xf32>
    %86 = vector.shape_cast %83 : vector<8x16xf32> to vector<8x1x16xf32>
    tpu.vector_store %arg5[%c0_49, %c4_50, %c0_51], %86 {strides = array<i32>} : memref<8x16x16xf32, #tpu.memory_space<vmem>>, vector<8x1x16xf32>,
    %87 = vector.extract_strided_slice %66 {offsets = [0, 80], sizes = [8, 16], strides = [1, 1]} : vector<8x256xf32> to vector<8x16xf32>
    %c0_52 = arith.constant 0 : index
    %c5 = arith.constant 5 : index
    %c0_53 = arith.constant 0 : index
    %88 = vector.load %arg5[%c0_52, %c5, %c0_53] : memref<8x16x16xf32, #tpu.memory_space<vmem>>, vector<8x1x16xf32>
    %89 = vector.shape_cast %88 : vector<8x1x16xf32> to vector<8x16xf32>
    %90 = vector.shape_cast %87 : vector<8x16xf32> to vector<8x1x16xf32>
    tpu.vector_store %arg5[%c0_52, %c5, %c0_53], %90 {strides = array<i32>} : memref<8x16x16xf32, #tpu.memory_space<vmem>>, vector<8x1x16xf32>,
    %91 = vector.extract_strided_slice %66 {offsets = [0, 96], sizes = [8, 16], strides = [1, 1]} : vector<8x256xf32> to vector<8x16xf32>
    %c0_54 = arith.constant 0 : index
    %c6 = arith.constant 6 : index
    %c0_55 = arith.constant 0 : index
    %92 = vector.load %arg5[%c0_54, %c6, %c0_55] : memref<8x16x16xf32, #tpu.memory_space<vmem>>, vector<8x1x16xf32>
    %93 = vector.shape_cast %92 : vector<8x1x16xf32> to vector<8x16xf32>
    %94 = vector.shape_cast %91 : vector<8x16xf32> to vector<8x1x16xf32>
    tpu.vector_store %arg5[%c0_54, %c6, %c0_55], %94 {strides = array<i32>} : memref<8x16x16xf32, #tpu.memory_space<vmem>>, vector<8x1x16xf32>,
    %95 = vector.extract_strided_slice %66 {offsets = [0, 112], sizes = [8, 16], strides = [1, 1]} : vector<8x256xf32> to vector<8x16xf32>
    %c0_56 = arith.constant 0 : index
    %c7 = arith.constant 7 : index
    %c0_57 = arith.constant 0 : index
    %96 = vector.load %arg5[%c0_56, %c7, %c0_57] : memref<8x16x16xf32, #tpu.memory_space<vmem>>, vector<8x1x16xf32>
    %97 = vector.shape_cast %96 : vector<8x1x16xf32> to vector<8x16xf32>
    %98 = vector.shape_cast %95 : vector<8x16xf32> to vector<8x1x16xf32>
    tpu.vector_store %arg5[%c0_56, %c7, %c0_57], %98 {strides = array<i32>} : memref<8x16x16xf32, #tpu.memory_space<vmem>>, vector<8x1x16xf32>,
    %99 = vector.extract_strided_slice %66 {offsets = [0, 128], sizes = [8, 16], strides = [1, 1]} : vector<8x256xf32> to vector<8x16xf32>
    %c0_58 = arith.constant 0 : index
    %c8_59 = arith.constant 8 : index
    %c0_60 = arith.constant 0 : index
    %100 = vector.load %arg5[%c0_58, %c8_59, %c0_60] : memref<8x16x16xf32, #tpu.memory_space<vmem>>, vector<8x1x16xf32>
    %101 = vector.shape_cast %100 : vector<8x1x16xf32> to vector<8x16xf32>
    %102 = vector.shape_cast %99 : vector<8x16xf32> to vector<8x1x16xf32>
    tpu.vector_store %arg5[%c0_58, %c8_59, %c0_60], %102 {strides = array<i32>} : memref<8x16x16xf32, #tpu.memory_space<vmem>>, vector<8x1x16xf32>,
    %103 = vector.extract_strided_slice %66 {offsets = [0, 144], sizes = [8, 16], strides = [1, 1]} : vector<8x256xf32> to vector<8x16xf32>
    %c0_61 = arith.constant 0 : index
    %c9 = arith.constant 9 : index
    %c0_62 = arith.constant 0 : index
    %104 = vector.load %arg5[%c0_61, %c9, %c0_62] : memref<8x16x16xf32, #tpu.memory_space<vmem>>, vector<8x1x16xf32>
    %105 = vector.shape_cast %104 : vector<8x1x16xf32> to vector<8x16xf32>
    %106 = vector.shape_cast %103 : vector<8x16xf32> to vector<8x1x16xf32>
    tpu.vector_store %arg5[%c0_61, %c9, %c0_62], %106 {strides = array<i32>} : memref<8x16x16xf32, #tpu.memory_space<vmem>>, vector<8x1x16xf32>,
    %107 = vector.extract_strided_slice %66 {offsets = [0, 160], sizes = [8, 16], strides = [1, 1]} : vector<8x256xf32> to vector<8x16xf32>
    %c0_63 = arith.constant 0 : index
    %c10 = arith.constant 10 : index
    %c0_64 = arith.constant 0 : index
    %108 = vector.load %arg5[%c0_63, %c10, %c0_64] : memref<8x16x16xf32, #tpu.memory_space<vmem>>, vector<8x1x16xf32>
    %109 = vector.shape_cast %108 : vector<8x1x16xf32> to vector<8x16xf32>
    %110 = vector.shape_cast %107 : vector<8x16xf32> to vector<8x1x16xf32>
    tpu.vector_store %arg5[%c0_63, %c10, %c0_64], %110 {strides = array<i32>} : memref<8x16x16xf32, #tpu.memory_space<vmem>>, vector<8x1x16xf32>,
    %111 = vector.extract_strided_slice %66 {offsets = [0, 176], sizes = [8, 16], strides = [1, 1]} : vector<8x256xf32> to vector<8x16xf32>
    %c0_65 = arith.constant 0 : index
    %c11 = arith.constant 11 : index
    %c0_66 = arith.constant 0 : index
    %112 = vector.load %arg5[%c0_65, %c11, %c0_66] : memref<8x16x16xf32, #tpu.memory_space<vmem>>, vector<8x1x16xf32>
    %113 = vector.shape_cast %112 : vector<8x1x16xf32> to vector<8x16xf32>
    %114 = vector.shape_cast %111 : vector<8x16xf32> to vector<8x1x16xf32>
    tpu.vector_store %arg5[%c0_65, %c11, %c0_66], %114 {strides = array<i32>} : memref<8x16x16xf32, #tpu.memory_space<vmem>>, vector<8x1x16xf32>,
    %115 = vector.extract_strided_slice %66 {offsets = [0, 192], sizes = [8, 16], strides = [1, 1]} : vector<8x256xf32> to vector<8x16xf32>
    %c0_67 = arith.constant 0 : index
    %c12_68 = arith.constant 12 : index
    %c0_69 = arith.constant 0 : index
    %116 = vector.load %arg5[%c0_67, %c12_68, %c0_69] : memref<8x16x16xf32, #tpu.memory_space<vmem>>, vector<8x1x16xf32>
    %117 = vector.shape_cast %116 : vector<8x1x16xf32> to vector<8x16xf32>
    %118 = vector.shape_cast %115 : vector<8x16xf32> to vector<8x1x16xf32>
    tpu.vector_store %arg5[%c0_67, %c12_68, %c0_69], %118 {strides = array<i32>} : memref<8x16x16xf32, #tpu.memory_space<vmem>>, vector<8x1x16xf32>,
    %119 = vector.extract_strided_slice %66 {offsets = [0, 208], sizes = [8, 16], strides = [1, 1]} : vector<8x256xf32> to vector<8x16xf32>
    %c0_70 = arith.constant 0 : index
    %c13 = arith.constant 13 : index
    %c0_71 = arith.constant 0 : index
    %120 = vector.load %arg5[%c0_70, %c13, %c0_71] : memref<8x16x16xf32, #tpu.memory_space<vmem>>, vector<8x1x16xf32>
    %121 = vector.shape_cast %120 : vector<8x1x16xf32> to vector<8x16xf32>
    %122 = vector.shape_cast %119 : vector<8x16xf32> to vector<8x1x16xf32>
    tpu.vector_store %arg5[%c0_70, %c13, %c0_71], %122 {strides = array<i32>} : memref<8x16x16xf32, #tpu.memory_space<vmem>>, vector<8x1x16xf32>,
    %123 = vector.extract_strided_slice %66 {offsets = [0, 224], sizes = [8, 16], strides = [1, 1]} : vector<8x256xf32> to vector<8x16xf32>
    %c0_72 = arith.constant 0 : index
    %c14 = arith.constant 14 : index
    %c0_73 = arith.constant 0 : index
    %124 = vector.load %arg5[%c0_72, %c14, %c0_73] : memref<8x16x16xf32, #tpu.memory_space<vmem>>, vector<8x1x16xf32>
    %125 = vector.shape_cast %124 : vector<8x1x16xf32> to vector<8x16xf32>
    %126 = vector.shape_cast %123 : vector<8x16xf32> to vector<8x1x16xf32>
    tpu.vector_store %arg5[%c0_72, %c14, %c0_73], %126 {strides = array<i32>} : memref<8x16x16xf32, #tpu.memory_space<vmem>>, vector<8x1x16xf32>,
    %127 = vector.extract_strided_slice %66 {offsets = [0, 240], sizes = [8, 16], strides = [1, 1]} : vector<8x256xf32> to vector<8x16xf32>
    %c0_74 = arith.constant 0 : index
    %c15_75 = arith.constant 15 : index
    %c0_76 = arith.constant 0 : index
    %128 = vector.load %arg5[%c0_74, %c15_75, %c0_76] : memref<8x16x16xf32, #tpu.memory_space<vmem>>, vector<8x1x16xf32>
    %129 = vector.shape_cast %128 : vector<8x1x16xf32> to vector<8x16xf32>
    %130 = vector.shape_cast %127 : vector<8x16xf32> to vector<8x1x16xf32>
    tpu.vector_store %arg5[%c0_74, %c15_75, %c0_76], %130 {strides = array<i32>} : memref<8x16x16xf32, #tpu.memory_space<vmem>>, vector<8x1x16xf32>,
    %131 = tpu.iota {dimensions = array<i32: 0>} : vector<16x32xi32>
    %132 = tpu.iota {dimensions = array<i32: 1>} : vector<16x32xi32>
    %c2_i32 = arith.constant 2 : i32
    %133 = vector.broadcast %c2_i32 : i32 to vector<16x32xi32>
    %134 = arith.muli %133, %131 : vector<16x32xi32>
    %135 = arith.cmpi eq, %132, %134 : vector<16x32xi32>
    %136 = arith.extui %135 : vector<16x32xi1> to vector<16x32xi32>
    %137 = arith.sitofp %136 : vector<16x32xi32> to vector<16x32xf32>
    %c2_i32_77 = arith.constant 2 : i32
    %138 = vector.broadcast %c2_i32_77 : i32 to vector<16x32xi32>
    %139 = arith.muli %138, %131 : vector<16x32xi32>
    %c1_i32_78 = arith.constant 1 : i32
    %140 = vector.broadcast %c1_i32_78 : i32 to vector<16x32xi32>
    %141 = arith.addi %139, %140 : vector<16x32xi32>
    %142 = arith.cmpi eq, %132, %141 : vector<16x32xi32>
    %143 = arith.extui %142 : vector<16x32xi1> to vector<16x32xi32>
    %144 = arith.sitofp %143 : vector<16x32xi32> to vector<16x32xf32>
    %c0_79 = arith.constant 0 : index
    %c0_80 = arith.constant 0 : index
    %c0_81 = arith.constant 0 : index
    %145 = vector.load %arg5[%c0_79, %c0_80, %c0_81] : memref<8x16x16xf32, #tpu.memory_space<vmem>>, vector<2x16x16xf32>
    %c2_82 = arith.constant 2 : index
    %c0_83 = arith.constant 0 : index
    %c0_84 = arith.constant 0 : index
    %146 = vector.load %arg5[%c2_82, %c0_83, %c0_84] : memref<8x16x16xf32, #tpu.memory_space<vmem>>, vector<2x16x16xf32>
    %147 = vector.shape_cast %145 : vector<2x16x16xf32> to vector<32x16xf32>
    %cst_85 = arith.constant dense<0.000000e+00> : vector<32x32xf32>
    %148 = tpu.matmul %147, %137, %cst_85 {dimension_numbers = #tpu.dot_dimension_numbers<[1], [0], [0], [1], [0, 0, 1, 1], [], []>} : vector<32x16xf32>, vector<16x32xf32>, vector<32x32xf32> -> vector<32x32xf32>
    %149 = vector.shape_cast %146 : vector<2x16x16xf32> to vector<32x16xf32>
    %cst_86 = arith.constant dense<0.000000e+00> : vector<32x32xf32>
    %150 = tpu.matmul %149, %144, %cst_86 {dimension_numbers = #tpu.dot_dimension_numbers<[1], [0], [0], [1], [0, 0, 1, 1], [], []>} : vector<32x16xf32>, vector<16x32xf32>, vector<32x32xf32> -> vector<32x32xf32>
    %151 = arith.addf %148, %150 : vector<32x32xf32>
    %152 = vector.shape_cast %151 : vector<32x32xf32> to vector<2x16x32xf32>
    %c0_87 = arith.constant 0 : index
    %c0_88 = arith.constant 0 : index
    %c0_89 = arith.constant 0 : index
    %c0_90 = arith.constant 0 : index
    %153 = vector.load %arg3[%c0_87, %c0_88, %c0_89, %c0_90] : memref<1x2x16x64xf32, #tpu.memory_space<vmem>>, vector<1x2x16x32xf32>
    %154 = vector.shape_cast %153 : vector<1x2x16x32xf32> to vector<2x16x32xf32>
    %155 = vector.shape_cast %152 : vector<2x16x32xf32> to vector<1x2x16x32xf32>
    tpu.vector_store %arg3[%c0_87, %c0_88, %c0_89, %c0_90], %155 {strides = array<i32>} : memref<1x2x16x64xf32, #tpu.memory_space<vmem>>, vector<1x2x16x32xf32>,
    %c4_91 = arith.constant 4 : index
    %c0_92 = arith.constant 0 : index
    %c0_93 = arith.constant 0 : index
    %156 = vector.load %arg5[%c4_91, %c0_92, %c0_93] : memref<8x16x16xf32, #tpu.memory_space<vmem>>, vector<2x16x16xf32>
    %c6_94 = arith.constant 6 : index
    %c0_95 = arith.constant 0 : index
    %c0_96 = arith.constant 0 : index
    %157 = vector.load %arg5[%c6_94, %c0_95, %c0_96] : memref<8x16x16xf32, #tpu.memory_space<vmem>>, vector<2x16x16xf32>
    %158 = vector.shape_cast %156 : vector<2x16x16xf32> to vector<32x16xf32>
    %cst_97 = arith.constant dense<0.000000e+00> : vector<32x32xf32>
    %159 = tpu.matmul %158, %137, %cst_97 {dimension_numbers = #tpu.dot_dimension_numbers<[1], [0], [0], [1], [0, 0, 1, 1], [], []>} : vector<32x16xf32>, vector<16x32xf32>, vector<32x32xf32> -> vector<32x32xf32>
    %160 = vector.shape_cast %157 : vector<2x16x16xf32> to vector<32x16xf32>
    %cst_98 = arith.constant dense<0.000000e+00> : vector<32x32xf32>
    %161 = tpu.matmul %160, %144, %cst_98 {dimension_numbers = #tpu.dot_dimension_numbers<[1], [0], [0], [1], [0, 0, 1, 1], [], []>} : vector<32x16xf32>, vector<16x32xf32>, vector<32x32xf32> -> vector<32x32xf32>
    %162 = arith.addf %159, %161 : vector<32x32xf32>
    %163 = vector.shape_cast %162 : vector<32x32xf32> to vector<2x16x32xf32>
    %c0_99 = arith.constant 0 : index
    %c0_100 = arith.constant 0 : index
    %c0_101 = arith.constant 0 : index
    %c32_102 = arith.constant 32 : index
    %164 = vector.load %arg3[%c0_99, %c0_100, %c0_101, %c32_102] : memref<1x2x16x64xf32, #tpu.memory_space<vmem>>, vector<1x2x16x32xf32>
    %165 = vector.shape_cast %164 : vector<1x2x16x32xf32> to vector<2x16x32xf32>
    %166 = vector.shape_cast %163 : vector<2x16x32xf32> to vector<1x2x16x32xf32>
    tpu.vector_store %arg3[%c0_99, %c0_100, %c0_101, %c32_102], %166 {strides = array<i32>} : memref<1x2x16x64xf32, #tpu.memory_space<vmem>>, vector<1x2x16x32xf32>,
    return
  }
  func.func @transform_0(%arg0: i32) -> (i32, i32, i32) {
    %c0_i32 = arith.constant 0 : i32
    %c0_i32_0 = arith.constant 0 : i32
    %c0_i32_1 = arith.constant 0 : i32
    return %arg0, %c0_i32, %c0_i32_0 : i32, i32, i32
  }
  func.func @transform_1(%arg0: i32) -> (i32, i32) {
    %c0_i32 = arith.constant 0 : i32
    %c0_i32_0 = arith.constant 0 : i32
    %c0_i32_1 = arith.constant 0 : i32
    return %c0_i32, %c0_i32_0 : i32, i32
  }
  func.func @transform_2(%arg0: i32) -> (i32, i32, i32, i32) {
    %c0_i32 = arith.constant 0 : i32
    %c0_i32_0 = arith.constant 0 : i32
    %c0_i32_1 = arith.constant 0 : i32
    %c0_i32_2 = arith.constant 0 : i32
    return %arg0, %c0_i32, %c0_i32_0, %c0_i32_1 : i32, i32, i32, i32
  }
}

</mosaic_0001>

<llo_original>
// kernel: tpu_custom_call.1
$region0: #{tpu_custom_call.1}
  #allocation0 [shape = 'u32[]', space=smem, size = 0x4, offset = 0x4, fixed_abs, tag = 'smem constant byte address 0x4 - core index']
  #allocation1 [shape = 'u32[144,128]{1,0:T(1,128)}', space=vmem, size = 0x12000, scoped, tag = 'internal scratch']
  #allocation2 [shape = 'f32[36,256]{1,0:T(8,128)}', space=vmem, size = 0xa000, scoped, tag = 'scratch operand']
  #allocation3 [shape = 'f32[8,16,16]{2,1,0:T(8,128)}', space=vmem, size = 0x10000, scoped, tag = 'scratch operand']
  %s0 = inlined_call_operand.hbm [shape: f32[2,4,256], index: 0, kind: input, shape index: {}]
  %s1 = inlined_call_operand.hbm [shape: f32[8,36], index: 1, kind: input, shape index: {}]
  %s2 = inlined_call_operand.hbm [shape: f32[2,2,16,64], index: 2, kind: output, shape index: {}]
  %s3 = sld [smem:[#allocation0]]
  $region49: #{tpu_custom_call.1} parent=0
    _
  %s5 = ssub.s32 1, %s3
  %s6 = scalar_select 0, %s5, %s3
  $region1: #{tpu_custom_call.1} parent=0
    #allocation4 [shape = 'u8[8192]{0}', space=vmem, size = 0x2000, scoped, tag = 'input window, operand 0']
    #allocation5 [shape = 's32[2]{0}', space=sflag, size = 0x8, scoped, tag = 'scoped memory for tpu_custom_call.1']
    #allocation6 [shape = 's32[2]{0}', space=sflag, size = 0x8, scoped, tag = 'scoped memory for tpu_custom_call.1']
    #allocation7 [shape = 'u8[4096]{0}', space=vmem, size = 0x1000, scoped, tag = 'input window, operand 1, single buffered']
    #allocation8 [shape = 's32[1]{0}', space=sflag, size = 0x4, scoped, tag = 'scoped memory for tpu_custom_call.1']
    #allocation9 [shape = 'u8[32768]{0}', space=vmem, size = 0x8000, scoped, tag = 'output window, operand 0']
    %7 = vsyncpa [#allocation5], 0
    %s8 = scalar_lea.sflag [#allocation5], 1
    %9 = vsyncpa %s8, 0
    %10 = vsyncpa [#allocation8], 0
    %11 = vsyncpa [#allocation6], 0
    %s12 = scalar_lea.sflag [#allocation6], 1
    %13 = vsyncpa %s12, 0
    loop: start=0, step=1, limit=4
    $region2: #{tpu_custom_call.1} parent=1 // loop_pre_header
      _
    $region3: #{tpu_custom_call.1} parent=1 // loop_header
      %s15 = sphi 0, %s19
      %p16 = scmp.ge.s32.totalorder %s15, 4
      %s25 = sphi 0, %s27
      %s28 = sphi 0, %s25
      %s29 = sphi 0, %s28
      %s45 = sphi 0, %s29
      %s49 = sphi 0, %s49
      %s51 = sphi 0, %s49
      %s52 = sphi 0, %s51
      %s66 = sphi 0, %s52
      %s72 = sphi 0, %s74
      %s75 = sphi 0, %s72
      %s76 = sphi 0, %s75
      %s92 = sphi 0, %s76
    $region4: #{tpu_custom_call.1} parent=1 // loop_header_branch
      %18 = sbr.rel (%p16) target = $region8
    $region5: #{tpu_custom_call.1} parent=1 // loop_body
      %s20 = ssub.s32 %s15, 1
      %s21 = ssub.s32 %s15, 2
      %s22 = sadd.s32 %s15, 1
      %s23 = ssub.s32 %s15, %s22
      %p24 = scmp.eq.s32.totalorder %s23, 0
      %s26 = sadd.s32 %s25, 1
      %s27 = scalar_select %p24, %s25, %s26
      %p30 = pneg %p24
      %p31 = scmp.eq.s32.totalorder %s15, 1
      %p32 = por %p30, %p31
      %p33 = scmp.ne.s32.totalorder %s25, %s28
      %p34 = scmp.eq.s32.totalorder %s15, 0
      %p35 = por %p33, %p34
      %p36 = scmp.ne.s32.totalorder %s25, %s28
      %p37 = scmp.eq.s32.totalorder %s20, 1
      %p38 = por %p36, %p37
      %p39 = scmp.ne.s32.totalorder %s28, %s29
      %p40 = scmp.eq.s32.totalorder %s20, 0
      %p41 = por %p39, %p40
      %p42 = scmp.ne.s32.totalorder %s28, %s29
      %p43 = scmp.eq.s32.totalorder %s21, 1
      %p44 = por %p42, %p43
      %p46 = scmp.ne.s32.totalorder %s29, %s45
      %p47 = scmp.eq.s32.totalorder %s21, 0
      %p48 = por %p46, %p47
      %s50 = sadd.s32 %s49, 1
      %p53 = scmp.eq.s32.totalorder %s15, 1
      %p54 = scmp.ne.s32.totalorder %s49, %s51
      %p55 = scmp.eq.s32.totalorder %s15, 0
      %p56 = por %p54, %p55
      %p57 = scmp.ne.s32.totalorder %s49, %s51
      %p58 = scmp.eq.s32.totalorder %s20, 1
      %p59 = por %p57, %p58
      %p60 = scmp.ne.s32.totalorder %s51, %s52
      %p61 = scmp.eq.s32.totalorder %s20, 0
      %p62 = por %p60, %p61
      %p63 = scmp.ne.s32.totalorder %s51, %s52
      %p64 = scmp.eq.s32.totalorder %s21, 1
      %p65 = por %p63, %p64
      %p67 = scmp.ne.s32.totalorder %s52, %s66
      %p68 = scmp.eq.s32.totalorder %s21, 0
      %p69 = por %p67, %p68
      %s70 = ssub.s32 %s15, %s22
      %p71 = scmp.eq.s32.totalorder %s70, 0
      %s73 = sadd.s32 %s72, 1
      %s74 = scalar_select %p71, %s72, %s73
      %p77 = pneg %p71
      %p78 = scmp.eq.s32.totalorder %s15, 1
      %p79 = por %p77, %p78
      %p80 = scmp.ne.s32.totalorder %s72, %s75
      %p81 = scmp.eq.s32.totalorder %s15, 0
      %p82 = por %p80, %p81
      %p83 = scmp.ne.s32.totalorder %s72, %s75
      %p84 = scmp.eq.s32.totalorder %s20, 1
      %p85 = por %p83, %p84
      %p86 = scmp.ne.s32.totalorder %s75, %s76
      %p87 = scmp.eq.s32.totalorder %s20, 0
      %p88 = por %p86, %p87
      %p89 = scmp.ne.s32.totalorder %s75, %s76
      %p90 = scmp.eq.s32.totalorder %s21, 1
      %p91 = por %p89, %p90
      %p93 = scmp.ne.s32.totalorder %s76, %s92
      %p94 = scmp.eq.s32.totalorder %s21, 0
      %p95 = por %p93, %p94
      %p96 = scmp.le.s32.totalorder 1, %s15
      %p97 = scmp.lt.s32.totalorder %s15, 3
      %p98 = pnand %p96, %p97
      %p99 = pneg %p98
      // Predicated region
      $region9: #{tpu_custom_call.1} parent=5 // pred_check
        _
      $region10: #{tpu_custom_call.1} parent=5 // pred_check_branch
        %101 = sbr.rel (%p98) target = $region12
      $region11: #{tpu_custom_call.1} parent=5 // pred_region
        %s102 = ssub.s32 %s15, 1
        // Predicated region
        $region13: #{tpu_custom_call.1} parent=11 // pred_check
          %p103 = pneg %p62
        $region14: #{tpu_custom_call.1} parent=11 // pred_check_branch
          %105 = sbr.rel (%p103) target = $region16
        $region15: #{tpu_custom_call.1} parent=11 // pred_region
          %s107 = ssub.s32 128, 128
          %108 = vsyncadd [#allocation8], %s107
          %s110 = sshll.u32 [#allocation7], 4
          %s111 = int_to_ptr.vmem [resolvable:$true] %s110
          %113 = dma.hbm_to_vmem [thread:$0]  %s1, 128, %s111, [#allocation8]
        $region16: #{tpu_custom_call.1} parent=11 // pred_fallthru
          _
      $region12: #{tpu_custom_call.1} parent=5 // pred_fallthru
        _
      %p114 = scmp.lt.s32.totalorder %s15, 2
      // Predicated region
      $region17: #{tpu_custom_call.1} parent=5 // pred_check
        %p115 = pneg %p114
      $region18: #{tpu_custom_call.1} parent=5 // pred_check_branch
        %117 = sbr.rel (%p115) target = $region20
      $region19: #{tpu_custom_call.1} parent=5 // pred_region
        // Predicated region
        $region21: #{tpu_custom_call.1} parent=19 // pred_check
          %p118 = pneg %p35
        $region22: #{tpu_custom_call.1} parent=19 // pred_check_branch
          %120 = sbr.rel (%p118) target = $region24
        $region23: #{tpu_custom_call.1} parent=19 // pred_region
          %s121 = sand.u32 %s25, 1
          %s122 = scalar_lea.sflag [#allocation5], %s121
          %s123 = sand.u32 %s25, 1
          %s124 = smul.addr %s123, 8
          %s125 = scalar_lea.vmem [#allocation4], %s124
          %s127 = ssub.s32 128, 128
          %128 = vsyncadd %s122, %s127
          %s129 = smul.addr %s15, 2
          %s130 = smul.addr %s129, 64
          %s131 = scalar_lea.hbm %s0, %s130
          %s133 = sshll.u32 %s125, 4
          %s134 = int_to_ptr.vmem [resolvable:$true] %s133
          %136 = dma.hbm_to_vmem [thread:$0]  %s131, 128, %s134, %s122
        $region24: #{tpu_custom_call.1} parent=19 // pred_fallthru
          _
      $region20: #{tpu_custom_call.1} parent=5 // pred_fallthru
        _
      %p137 = scmp.le.s32.totalorder 1, %s15
      %p138 = scmp.lt.s32.totalorder %s15, 3
      %p139 = pnand %p137, %p138
      %p140 = pneg %p139
      // Predicated region
      $region25: #{tpu_custom_call.1} parent=5 // pred_check
        _
      $region26: #{tpu_custom_call.1} parent=5 // pred_check_branch
        %142 = sbr.rel (%p139) target = $region28
      $region27: #{tpu_custom_call.1} parent=5 // pred_region
        %s143 = ssub.s32 %s15, 1
        %s144 = sand.u32 %s28, 1
        %s145 = scalar_lea.sflag [#allocation5], %s144
        %s146 = sand.u32 %s28, 1
        %s147 = smul.addr %s146, 8
        %s148 = scalar_lea.vmem [#allocation4], %s147
        // Predicated region
        $region29: #{tpu_custom_call.1} parent=27 // pred_check
          %p149 = pneg %p41
        $region30: #{tpu_custom_call.1} parent=27 // pred_check_branch
          %151 = sbr.rel (%p149) target = $region32
        $region31: #{tpu_custom_call.1} parent=27 // pred_region
          %152 = dma.done %s145, 128
        $region32: #{tpu_custom_call.1} parent=27 // pred_fallthru
          _
        // Predicated region
        $region33: #{tpu_custom_call.1} parent=27 // pred_check
          %p153 = pneg %p62
        $region34: #{tpu_custom_call.1} parent=27 // pred_check_branch
          %155 = sbr.rel (%p153) target = $region36
        $region35: #{tpu_custom_call.1} parent=27 // pred_region
          %156 = dma.done [#allocation8], 128
        $region36: #{tpu_custom_call.1} parent=27 // pred_fallthru
          _
        %s157 = sand.u32 %s28, 1
        %s158 = scalar_lea.sflag [#allocation5], %s157
        %s159 = sand.u32 %s28, 1
        %s160 = smul.addr %s159, 8
        %s161 = scalar_lea.vmem [#allocation4], %s160
        %p162 = pneg %p41
        %p163 = pneg %p38
        %p164 = pneg %p62
        %p165 = pneg %p59
        %p166 = pneg %p88
        %p167 = pneg %p85
        %s168 = sand.u32 %s75, 1
        %s169 = scalar_lea.sflag [#allocation6], %s168
        %s170 = sand.u32 %s75, 1
        %s171 = smul.addr %s170, 32
        %s172 = scalar_lea.vmem [#allocation9], %s171
        %v173 = vld [vmem:[%s148] sm:$0xff]
        %v174 = vlaneseq
        %v175 = vand.u32 %v174, 127
        %v176 = vadd.s32 %v175, 128
        %vm177 = vcmp.lt.s32.totalorder %v175, 0
        %v178 = vsub.s32 0, %v175
        %v179 = vsel %vm177, %v178, %v175
        %v180 = vshrl.u32 %v179, 4
        %v181 = vand.u32 %v179, 15
        %v182 = vsub.s32 0, %v181
        %v183 = vsel %vm177, %v182, %v181
        %vm184 = vcmp.lt.s32.totalorder %v176, 0
        %v185 = vsub.s32 0, %v176
        %v186 = vsel %vm184, %v185, %v176
        %v187 = vshrl.u32 %v186, 4
        %v188 = vand.u32 %v186, 15
        %v189 = vsub.s32 0, %v188
        %v190 = vsel %vm184, %v189, %v188
        %vm191 = vcmp.ne.s32.totalorder %v183, 0
        %vm192 = vcmp.ne.s32.totalorder %v190, 0
        %vm193 = vcmp.lt.s32.totalorder %v183, 0
        %vm194 = vcmp.lt.s32.totalorder %v190, 0
        %vm195 = vmand %vm193, %vm191
        %vm196 = vmand %vm194, %vm192
        %v197 = vadd.s32 %v183, 16
        %v198 = vadd.s32 %v190, 16
        %v199 = vsel %vm195, %v197, %v183
        %v200 = vsel %vm196, %v198, %v190
        %vm201 = vcmp.ne.s32.totalorder %v199, 15
        %vm202 = vcmp.ne.s32.totalorder %v200, 15
        %v203 = vsel %vm201, 1, 0
        %v204 = vsel %vm202, 1, 0
        %vm205 = vcmp.eq.s32.totalorder %v203, 1
        %vm206 = vcmp.eq.s32.totalorder %v204, 1
        %v208 = vcombine.high %v173, %v173
        %v210 = vsel %vm205, %v173, 0.0
        %v211 = vsel %vm206, %v208, 0.0
        %vm212 = vcmp.ne.s32.totalorder %v199, 0
        %vm213 = vcmp.ne.s32.totalorder %v200, 0
        %v214 = vsel %vm212, 1, 0
        %v215 = vsel %vm213, 1, 0
        %vm216 = vcmp.eq.s32.totalorder %v214, 1
        %vm217 = vcmp.eq.s32.totalorder %v215, 1
        %v218 = vsel %vm216, %v173, 0.0
        %v219 = vsel %vm217, %v208, 0.0
        %222 = vrot.lane.b32.xlu0 %v210, 17
        %v223 = vpop.permute.xlu0 %222
        %224 = vrot.lane.b32.xlu0 %v211, 17
        %v225 = vpop.permute.xlu0 %224
        %vm226 = vcmask 138240
        %v227 = vsel %vm226, %v223, %v225
        %vm230 = vcmask 1043592
        %231 = vst.msk [vmem:[#allocation2] sm:$0xf] %vm230, %v223
        %232 = vst [vmem:[#allocation2 + $0x8] sm:$0xf] %v227
        %vm233 = vcmask 134144
        %234 = vst.msk [vmem:[#allocation2] sm:$0xf] %vm233, 0.0
        %v235 = vcombine.low %v173, %v173
        %236 = vrot.lane.b32.xlu0 %v235, 16
        %v237 = vpop.permute.xlu0 %236
        %238 = vrot.lane.b32.xlu0 %v173, 16
        %v239 = vpop.permute.xlu0 %238
        %vm240 = vcmask 130048
        %v241 = vsel %vm240, %v237, %v239
        %vm244 = vcmask 1047684
        %245 = vst.msk [vmem:[#allocation2] sm:$0xf0] %vm244, %v237
        %246 = vst [vmem:[#allocation2 + $0x8] sm:$0xf0] %v241
        %vm247 = vcmask 130052
        %248 = vst.msk [vmem:[#allocation2] sm:$0xf0] %vm247, 0.0
        %251 = vrot.lane.b32.xlu0 %v218, 15
        %v252 = vpop.permute.xlu0 %251
        %253 = vrot.lane.b32.xlu0 %v219, 15
        %v254 = vpop.permute.xlu0 %253
        %vm255 = vcmask 121856
        %v256 = vsel %vm255, %v252, %v254
        %vm259 = vcmask 1043576
        %260 = vst.msk [vmem:[#allocation2 + $0x10] sm:$0xf] %vm259, %v252
        %261 = vst [vmem:[#allocation2 + $0x18] sm:$0xf] %v256
        %vm262 = vcmask 117760
        %263 = vst.msk [vmem:[#allocation2 + $0x10] sm:$0xf] %vm262, 0.0
        %v264 = vrot.slane %v210, 4
        %v265 = vrot.slane %v211, 4
        %266 = vrot.lane.b32.xlu0 %v264, 1
        %v267 = vpop.permute.xlu0 %266
        %268 = vrot.lane.b32.xlu0 %v265, 1
        %v269 = vpop.permute.xlu0 %268
        %vm270 = vcmask 7168
        %v271 = vsel %vm270, %v267, %v269
        %vm274 = vcmask 1047564
        %275 = vst.msk [vmem:[#allocation2 + $0x10] sm:$0xf0] %vm274, %v267
        %276 = vst [vmem:[#allocation2 + $0x18] sm:$0xf0] %v271
        %vm277 = vcmask 7172
        %278 = vst.msk [vmem:[#allocation2 + $0x10] sm:$0xf0] %vm277, 0.0
        %279 = vst [vmem:[#allocation2 + $0x20] sm:$0xf] %v173
        %280 = vst [vmem:[#allocation2 + $0x28] sm:$0xf] %v208
        %v281 = vrot.slane %v218, 4
        %v282 = vrot.slane %v219, 4
        %283 = vrot.lane.b32.xlu0 %v281, 127
        %v284 = vpop.permute.xlu0 %283
        %285 = vrot.lane.b32.xlu0 %v282, 127
        %v286 = vpop.permute.xlu0 %285
        %vm287 = vcmask 1039360
        %v288 = vsel %vm287, %v284, %v286
        %291 = vst [vmem:[#allocation2 + $0x20] sm:$0xf0] %v288
        %vm292 = vcmask 1039364
        %293 = vst.msk [vmem:[#allocation2 + $0x28] sm:$0xf0] %vm292, %v286
        %vm294 = vcmask 1048572
        %295 = vst.msk [vmem:[#allocation2 + $0x28] sm:$0xf0] %vm294, 0.0
        %296 = vrot.lane.b32.xlu0 %v210, 113
        %v297 = vpop.permute.xlu0 %296
        %298 = vrot.lane.b32.xlu0 %v211, 113
        %v299 = vpop.permute.xlu0 %298
        %vm300 = vcmask 924672
        %v301 = vsel %vm300, %v297, %v299
        %304 = vst [vmem:[#allocation2 + $0x30] sm:$0xf] %v301
        %vm305 = vcmask 920576
        %306 = vst.msk [vmem:[#allocation2 + $0x38] sm:$0xf] %vm305, %v299
        %vm307 = vcmask 1044360
        %308 = vst.msk [vmem:[#allocation2 + $0x38] sm:$0xf] %vm307, 0.0
        %309 = vrot.lane.b32.xlu0 %v235, 112
        %v310 = vpop.permute.xlu0 %309
        %311 = vrot.lane.b32.xlu0 %v173, 112
        %v312 = vpop.permute.xlu0 %311
        %vm313 = vcmask 916480
        %v314 = vsel %vm313, %v310, %v312
        %317 = vst [vmem:[#allocation2 + $0x30] sm:$0xf0] %v314
        %vm318 = vcmask 916484
        %319 = vst.msk [vmem:[#allocation2 + $0x38] sm:$0xf0] %vm318, %v312
        %vm320 = vcmask 1048452
        %321 = vst.msk [vmem:[#allocation2 + $0x38] sm:$0xf0] %vm320, 0.0
        %322 = vrot.lane.b32.xlu0 %v218, 111
        %v323 = vpop.permute.xlu0 %322
        %324 = vrot.lane.b32.xlu0 %v219, 111
        %v325 = vpop.permute.xlu0 %324
        %vm326 = vcmask 908288
        %v327 = vsel %vm326, %v323, %v325
        %330 = vst [vmem:[#allocation2 + $0x40] sm:$0xf] %v327
        %vm331 = vcmask 904192
        %332 = vst.msk [vmem:[#allocation2 + $0x48] sm:$0xf] %vm331, %v325
        %vm333 = vcmask 1044344
        %334 = vst.msk [vmem:[#allocation2 + $0x48] sm:$0xf] %vm333, 0.0
        %v335 = vld [vmem:[#allocation7] sm:$0xff]
        %v336 = vld [vmem:[#allocation2] sm:$0xff]
        %v337 = vld [vmem:[#allocation2 + $0x8] sm:$0xff]
        %v338 = vld [vmem:[#allocation2 + $0x10] sm:$0xff]
        %v339 = vld [vmem:[#allocation2 + $0x18] sm:$0xff]
        %v340 = vld [vmem:[#allocation2 + $0x20] sm:$0xff]
        %v341 = vld [vmem:[#allocation2 + $0x28] sm:$0xff]
        %v342 = vld [vmem:[#allocation2 + $0x30] sm:$0xff]
        %v343 = vld [vmem:[#allocation2 + $0x38] sm:$0xff]
        %v344 = vld [vmem:[#allocation2 + $0x40] sm:$0xf]
        %v345 = vld [vmem:[#allocation2 + $0x48] sm:$0xf]
        %vm346 = vcmask 293888
        %v348 = vsel %vm346, %v335, 0
        %vm350 = vcmask 1043456
        %v352 = vsel %vm350, %v344, 0
        %v355 = vsel %vm350, %v345, 0
        %357 = vmatprep.subr.mxu0 %v337
        %358 = vmatpush1.msra.mxu0 %v336
        %359 = vmatprep.subr.mxu0 %v339
        %360 = vmatpush1.msra.mxu0 %v338
        %361 = vmatprep.subr.mxu0 %v341
        %362 = vmatpush1.msra.mxu0 %v340
        %363 = vmatprep.subr.mxu0 %v343
        %364 = vmatpush1.msra.mxu0 %v342
        %365 = vmatprep.subr.mxu0 %v355
        %366 = vmatpush1.msra.mxu0 %v352
        %367 = vmatprep.subr.mxu0 0.0
        %368 = vmatpush1.msra.mxu0 0.0
        %369 = vmatprep.subr.mxu0 0.0
        %370 = vmatpush1.msra.mxu0 0.0
        %371 = vmatprep.subr.mxu0 0.0
        %372 = vmatpush1.msra.mxu0 0.0
        %373 = vmatprep.subr.mxu0 0.0
        %374 = vmatpush1.msra.mxu0 0.0
        %375 = vmatprep.subr.mxu0 0.0
        %376 = vmatpush1.msra.mxu0 0.0
        %377 = vmatprep.subr.mxu0 0.0
        %378 = vmatpush1.msra.mxu0 0.0
        %379 = vmatprep.subr.mxu0 0.0
        %380 = vmatpush1.msra.mxu0 0.0
        %381 = vmatprep.subr.mxu0 0.0
        %382 = vmatpush1.msra.mxu0 0.0
        %383 = vmatprep.subr.mxu0 0.0
        %384 = vmatpush1.msra.mxu0 0.0
        %385 = vmatprep.subr.mxu0 0.0
        %386 = vmatpush1.msra.mxu0 0.0
        %387 = vmatprep.subr.mxu0 0.0
        %388 = vmatpush1.msra.mxu0 0.0
        %389 = vmatprep.subr.mxu0 0.0
        %390 = vmatpush1.msra.mxu0 0.0
        %391 = vmatprep.subr.mxu0 0.0
        %392 = vmatpush1.msra.mxu0 0.0
        %393 = vmatprep.subr.mxu0 0.0
        %394 = vmatpush1.msra.mxu0 0.0
        %395 = vmatprep.subr.mxu0 0.0
        %396 = vmatpush1.msra.mxu0 0.0
        %397 = vmatprep.subr.mxu0 0.0
        %398 = vmatpush1.msra.mxu0 0.0
        %399 = vmatprep.subr.mxu0 0.0
        %400 = vmatpush1.msra.mxu0 0.0
        %401 = vmatprep.subr.mxu0 0.0
        %402 = vmatpush1.msra.mxu0 0.0
        %403 = vmatprep.subr.mxu0 0.0
        %404 = vmatpush1.msra.mxu0 0.0
        %405 = vmatprep.subr.mxu0 0.0
        %406 = vmatpush1.msra.mxu0 0.0
        %407 = vmatprep.subr.mxu0 0.0
        %408 = vmatpush1.msra.mxu0 0.0
        %409 = vmatprep.subr.mxu0 0.0
        %410 = vmatpush1.msra.mxu0 0.0
        %411 = vmatprep.subr.mxu0 0.0
        %412 = vmatpush1.msra.mxu0 0.0
        %413 = vmatprep.subr.mxu0 0.0
        %414 = vmatpush1.msra.mxu0 0.0
        %415 = vmatprep.subr.mxu0 0.0
        %416 = vmatpush1.msra.mxu0 0.0
        %417 = vmatprep.subr.mxu0 0.0
        %418 = vmatpush1.msra.mxu0 0.0
        %419 = vmatprep.subr.mxu0 0.0
        %420 = vmatpush1.msra.mxu0 0.0
        %421 = vmatprep.mubr.f32.mxu0 0.0
        %422 = vmatmul.mubr.f32.gmra.mrb[0].mxu0 %v348
        %v423 = vpop.f32.mrb[0].mxu0
        %v424 = vadd.f32 0.0, %v423
        %v425 = vpop.f32.mrb[0].mxu0
        %v426 = vadd.f32 0.0, %v425
        %427 = vdwg.mxu0
        %v429 = vcombine.high %v424, %v424
        %v431 = vunpack.c.l.s4 1966171168
        %v432 = vunpack.c.0.s8 %v431
        %v433 = vlaneseq
        %v434 = vshrl.u32 %v433, 7
        %v435 = vsub.s32 %v432, %v434
        %v436 = vrot.slane %v424, %v435
        %v438 = vunpack.c.l.s4 1966171168
        %v439 = vunpack.c.0.s8 %v438
        %v440 = vlaneseq
        %v441 = vshrl.u32 %v440, 7
        %v442 = vsub.s32 %v439, %v441
        %v443 = vrot.slane %v429, %v442
        %v444 = vcombine.high %v436, %v436
        %v445 = vcombine.high %v443, %v443
        %v447 = vunpack.c.l.s4 1966171168
        %v448 = vunpack.c.0.s8 %v447
        %v449 = vlaneseq
        %v450 = vshrl.u32 %v449, 7
        %v451 = vsub.s32 %v448, %v450
        %v452 = vrot.slane %v436, %v451
        %v454 = vunpack.c.l.s4 1966171168
        %v455 = vunpack.c.0.s8 %v454
        %v456 = vlaneseq
        %v457 = vshrl.u32 %v456, 7
        %v458 = vsub.s32 %v455, %v457
        %v459 = vrot.slane %v443, %v458
        %v461 = vunpack.c.l.s4 1966171168
        %v462 = vunpack.c.0.s8 %v461
        %v463 = vlaneseq
        %v464 = vshrl.u32 %v463, 7
        %v465 = vsub.s32 %v462, %v464
        %v466 = vrot.slane %v444, %v465
        %v468 = vunpack.c.l.s4 1966171168
        %v469 = vunpack.c.0.s8 %v468
        %v470 = vlaneseq
        %v471 = vshrl.u32 %v470, 7
        %v472 = vsub.s32 %v469, %v471
        %v473 = vrot.slane %v445, %v472
        %v474 = vcombine.high %v452, %v452
        %v475 = vcombine.high %v459, %v459
        %v476 = vcombine.high %v466, %v466
        %v477 = vcombine.high %v473, %v473
        %vm486 = vcmask 122880
        %487 = vst.msk [vmem:[#allocation3] sm:$0x1] %vm486, %v452
        %488 = vst.msk [vmem:[#allocation3 + $0x10] sm:$0x1] %vm486, %v466
        %489 = vst.msk [vmem:[#allocation3 + $0x20] sm:$0x1] %vm486, %v474
        %490 = vst.msk [vmem:[#allocation3 + $0x30] sm:$0x1] %vm486, %v476
        %491 = vst.msk [vmem:[#allocation3 + $0x40] sm:$0x1] %vm486, %v459
        %492 = vst.msk [vmem:[#allocation3 + $0x50] sm:$0x1] %vm486, %v473
        %493 = vst.msk [vmem:[#allocation3 + $0x60] sm:$0x1] %vm486, %v475
        %494 = vst.msk [vmem:[#allocation3 + $0x70] sm:$0x1] %vm486, %v477
        %v495 = vlaneseq
        %v496 = vshrl.u32 %v495, 7
        %v497 = vsub.s32 0, %v496
        %v498 = vrot.slane %v452, %v497
        %v499 = vlaneseq
        %v500 = vshrl.u32 %v499, 7
        %v501 = vsub.s32 0, %v500
        %v502 = vrot.slane %v466, %v501
        %v503 = vlaneseq
        %v504 = vshrl.u32 %v503, 7
        %v505 = vsub.s32 0, %v504
        %v506 = vrot.slane %v474, %v505
        %v507 = vlaneseq
        %v508 = vshrl.u32 %v507, 7
        %v509 = vsub.s32 0, %v508
        %v510 = vrot.slane %v476, %v509
        %v511 = vlaneseq
        %v512 = vshrl.u32 %v511, 7
        %v513 = vsub.s32 0, %v512
        %v514 = vrot.slane %v459, %v513
        %v515 = vlaneseq
        %v516 = vshrl.u32 %v515, 7
        %v517 = vsub.s32 0, %v516
        %v518 = vrot.slane %v473, %v517
        %v519 = vlaneseq
        %v520 = vshrl.u32 %v519, 7
        %v521 = vsub.s32 0, %v520
        %v522 = vrot.slane %v475, %v521
        %v523 = vlaneseq
        %v524 = vshrl.u32 %v523, 7
        %v525 = vsub.s32 0, %v524
        %v526 = vrot.slane %v477, %v525
        %527 = vrot.lane.b32.xlu0 %v498, 112
        %v528 = vpop.permute.xlu0 %527
        %529 = vrot.lane.b32.xlu0 %v502, 112
        %v530 = vpop.permute.xlu0 %529
        %531 = vrot.lane.b32.xlu0 %v506, 112
        %v532 = vpop.permute.xlu0 %531
        %533 = vrot.lane.b32.xlu0 %v510, 112
        %v534 = vpop.permute.xlu0 %533
        %535 = vrot.lane.b32.xlu0 %v514, 112
        %v536 = vpop.permute.xlu0 %535
        %537 = vrot.lane.b32.xlu0 %v518, 112
        %v538 = vpop.permute.xlu0 %537
        %539 = vrot.lane.b32.xlu0 %v522, 112
        %v540 = vpop.permute.xlu0 %539
        %541 = vrot.lane.b32.xlu0 %v526, 112
        %v542 = vpop.permute.xlu0 %541
        %551 = vst.msk [vmem:[#allocation3 + $0x1] sm:$0x1] %vm486, %v528
        %552 = vst.msk [vmem:[#allocation3 + $0x11] sm:$0x1] %vm486, %v530
        %553 = vst.msk [vmem:[#allocation3 + $0x21] sm:$0x1] %vm486, %v532
        %554 = vst.msk [vmem:[#allocation3 + $0x31] sm:$0x1] %vm486, %v534
        %555 = vst.msk [vmem:[#allocation3 + $0x41] sm:$0x1] %vm486, %v536
        %556 = vst.msk [vmem:[#allocation3 + $0x51] sm:$0x1] %vm486, %v538
        %557 = vst.msk [vmem:[#allocation3 + $0x61] sm:$0x1] %vm486, %v540
        %558 = vst.msk [vmem:[#allocation3 + $0x71] sm:$0x1] %vm486, %v542
        %559 = vrot.lane.b32.xlu0 %v498, 96
        %v560 = vpop.permute.xlu0 %559
        %561 = vrot.lane.b32.xlu0 %v502, 96
        %v562 = vpop.permute.xlu0 %561
        %563 = vrot.lane.b32.xlu0 %v506, 96
        %v564 = vpop.permute.xlu0 %563
        %565 = vrot.lane.b32.xlu0 %v510, 96
        %v566 = vpop.permute.xlu0 %565
        %567 = vrot.lane.b32.xlu0 %v514, 96
        %v568 = vpop.permute.xlu0 %567
        %569 = vrot.lane.b32.xlu0 %v518, 96
        %v570 = vpop.permute.xlu0 %569
        %571 = vrot.lane.b32.xlu0 %v522, 96
        %v572 = vpop.permute.xlu0 %571
        %573 = vrot.lane.b32.xlu0 %v526, 96
        %v574 = vpop.permute.xlu0 %573
        %583 = vst.msk [vmem:[#allocation3 + $0x2] sm:$0x1] %vm486, %v560
        %584 = vst.msk [vmem:[#allocation3 + $0x12] sm:$0x1] %vm486, %v562
        %585 = vst.msk [vmem:[#allocation3 + $0x22] sm:$0x1] %vm486, %v564
        %586 = vst.msk [vmem:[#allocation3 + $0x32] sm:$0x1] %vm486, %v566
        %587 = vst.msk [vmem:[#allocation3 + $0x42] sm:$0x1] %vm486, %v568
        %588 = vst.msk [vmem:[#allocation3 + $0x52] sm:$0x1] %vm486, %v570
        %589 = vst.msk [vmem:[#allocation3 + $0x62] sm:$0x1] %vm486, %v572
        %590 = vst.msk [vmem:[#allocation3 + $0x72] sm:$0x1] %vm486, %v574
        %591 = vrot.lane.b32.xlu0 %v498, 80
        %v592 = vpop.permute.xlu0 %591
        %593 = vrot.lane.b32.xlu0 %v502, 80
        %v594 = vpop.permute.xlu0 %593
        %595 = vrot.lane.b32.xlu0 %v506, 80
        %v596 = vpop.permute.xlu0 %595
        %597 = vrot.lane.b32.xlu0 %v510, 80
        %v598 = vpop.permute.xlu0 %597
        %599 = vrot.lane.b32.xlu0 %v514, 80
        %v600 = vpop.permute.xlu0 %599
        %601 = vrot.lane.b32.xlu0 %v518, 80
        %v602 = vpop.permute.xlu0 %601
        %603 = vrot.lane.b32.xlu0 %v522, 80
        %v604 = vpop.permute.xlu0 %603
        %605 = vrot.lane.b32.xlu0 %v526, 80
        %v606 = vpop.permute.xlu0 %605
        %615 = vst.msk [vmem:[#allocation3 + $0x3] sm:$0x1] %vm486, %v592
        %616 = vst.msk [vmem:[#allocation3 + $0x13] sm:$0x1] %vm486, %v594
        %617 = vst.msk [vmem:[#allocation3 + $0x23] sm:$0x1] %vm486, %v596
        %618 = vst.msk [vmem:[#allocation3 + $0x33] sm:$0x1] %vm486, %v598
        %619 = vst.msk [vmem:[#allocation3 + $0x43] sm:$0x1] %vm486, %v600
        %620 = vst.msk [vmem:[#allocation3 + $0x53] sm:$0x1] %vm486, %v602
        %621 = vst.msk [vmem:[#allocation3 + $0x63] sm:$0x1] %vm486, %v604
        %622 = vst.msk [vmem:[#allocation3 + $0x73] sm:$0x1] %vm486, %v606
        %623 = vrot.lane.b32.xlu0 %v498, 64
        %v624 = vpop.permute.xlu0 %623
        %625 = vrot.lane.b32.xlu0 %v502, 64
        %v626 = vpop.permute.xlu0 %625
        %627 = vrot.lane.b32.xlu0 %v506, 64
        %v628 = vpop.permute.xlu0 %627
        %629 = vrot.lane.b32.xlu0 %v510, 64
        %v630 = vpop.permute.xlu0 %629
        %631 = vrot.lane.b32.xlu0 %v514, 64
        %v632 = vpop.permute.xlu0 %631
        %633 = vrot.lane.b32.xlu0 %v518, 64
        %v634 = vpop.permute.xlu0 %633
        %635 = vrot.lane.b32.xlu0 %v522, 64
        %v636 = vpop.permute.xlu0 %635
        %637 = vrot.lane.b32.xlu0 %v526, 64
        %v638 = vpop.permute.xlu0 %637
        %647 = vst.msk [vmem:[#allocation3 + $0x4] sm:$0x1] %vm486, %v624
        %648 = vst.msk [vmem:[#allocation3 + $0x14] sm:$0x1] %vm486, %v626
        %649 = vst.msk [vmem:[#allocation3 + $0x24] sm:$0x1] %vm486, %v628
        %650 = vst.msk [vmem:[#allocation3 + $0x34] sm:$0x1] %vm486, %v630
        %651 = vst.msk [vmem:[#allocation3 + $0x44] sm:$0x1] %vm486, %v632
        %652 = vst.msk [vmem:[#allocation3 + $0x54] sm:$0x1] %vm486, %v634
        %653 = vst.msk [vmem:[#allocation3 + $0x64] sm:$0x1] %vm486, %v636
        %654 = vst.msk [vmem:[#allocation3 + $0x74] sm:$0x1] %vm486, %v638
        %655 = vrot.lane.b32.xlu0 %v498, 48
        %v656 = vpop.permute.xlu0 %655
        %657 = vrot.lane.b32.xlu0 %v502, 48
        %v658 = vpop.permute.xlu0 %657
        %659 = vrot.lane.b32.xlu0 %v506, 48
        %v660 = vpop.permute.xlu0 %659
        %661 = vrot.lane.b32.xlu0 %v510, 48
        %v662 = vpop.permute.xlu0 %661
        %663 = vrot.lane.b32.xlu0 %v514, 48
        %v664 = vpop.permute.xlu0 %663
        %665 = vrot.lane.b32.xlu0 %v518, 48
        %v666 = vpop.permute.xlu0 %665
        %667 = vrot.lane.b32.xlu0 %v522, 48
        %v668 = vpop.permute.xlu0 %667
        %669 = vrot.lane.b32.xlu0 %v526, 48
        %v670 = vpop.permute.xlu0 %669
        %679 = vst.msk [vmem:[#allocation3 + $0x5] sm:$0x1] %vm486, %v656
        %680 = vst.msk [vmem:[#allocation3 + $0x15] sm:$0x1] %vm486, %v658
        %681 = vst.msk [vmem:[#allocation3 + $0x25] sm:$0x1] %vm486, %v660
        %682 = vst.msk [vmem:[#allocation3 + $0x35] sm:$0x1] %vm486, %v662
        %683 = vst.msk [vmem:[#allocation3 + $0x45] sm:$0x1] %vm486, %v664
        %684 = vst.msk [vmem:[#allocation3 + $0x55] sm:$0x1] %vm486, %v666
        %685 = vst.msk [vmem:[#allocation3 + $0x65] sm:$0x1] %vm486, %v668
        %686 = vst.msk [vmem:[#allocation3 + $0x75] sm:$0x1] %vm486, %v670
        %687 = vrot.lane.b32.xlu0 %v498, 32
        %v688 = vpop.permute.xlu0 %687
        %689 = vrot.lane.b32.xlu0 %v502, 32
        %v690 = vpop.permute.xlu0 %689
        %691 = vrot.lane.b32.xlu0 %v506, 32
        %v692 = vpop.permute.xlu0 %691
        %693 = vrot.lane.b32.xlu0 %v510, 32
        %v694 = vpop.permute.xlu0 %693
        %695 = vrot.lane.b32.xlu0 %v514, 32
        %v696 = vpop.permute.xlu0 %695
        %697 = vrot.lane.b32.xlu0 %v518, 32
        %v698 = vpop.permute.xlu0 %697
        %699 = vrot.lane.b32.xlu0 %v522, 32
        %v700 = vpop.permute.xlu0 %699
        %701 = vrot.lane.b32.xlu0 %v526, 32
        %v702 = vpop.permute.xlu0 %701
        %711 = vst.msk [vmem:[#allocation3 + $0x6] sm:$0x1] %vm486, %v688
        %712 = vst.msk [vmem:[#allocation3 + $0x16] sm:$0x1] %vm486, %v690
        %713 = vst.msk [vmem:[#allocation3 + $0x26] sm:$0x1] %vm486, %v692
        %714 = vst.msk [vmem:[#allocation3 + $0x36] sm:$0x1] %vm486, %v694
        %715 = vst.msk [vmem:[#allocation3 + $0x46] sm:$0x1] %vm486, %v696
        %716 = vst.msk [vmem:[#allocation3 + $0x56] sm:$0x1] %vm486, %v698
        %717 = vst.msk [vmem:[#allocation3 + $0x66] sm:$0x1] %vm486, %v700
        %718 = vst.msk [vmem:[#allocation3 + $0x76] sm:$0x1] %vm486, %v702
        %719 = vrot.lane.b32.xlu0 %v498, 16
        %v720 = vpop.permute.xlu0 %719
        %721 = vrot.lane.b32.xlu0 %v502, 16
        %v722 = vpop.permute.xlu0 %721
        %723 = vrot.lane.b32.xlu0 %v506, 16
        %v724 = vpop.permute.xlu0 %723
        %725 = vrot.lane.b32.xlu0 %v510, 16
        %v726 = vpop.permute.xlu0 %725
        %727 = vrot.lane.b32.xlu0 %v514, 16
        %v728 = vpop.permute.xlu0 %727
        %729 = vrot.lane.b32.xlu0 %v518, 16
        %v730 = vpop.permute.xlu0 %729
        %731 = vrot.lane.b32.xlu0 %v522, 16
        %v732 = vpop.permute.xlu0 %731
        %733 = vrot.lane.b32.xlu0 %v526, 16
        %v734 = vpop.permute.xlu0 %733
        %743 = vst.msk [vmem:[#allocation3 + $0x7] sm:$0x1] %vm486, %v720
        %744 = vst.msk [vmem:[#allocation3 + $0x17] sm:$0x1] %vm486, %v722
        %745 = vst.msk [vmem:[#allocation3 + $0x27] sm:$0x1] %vm486, %v724
        %746 = vst.msk [vmem:[#allocation3 + $0x37] sm:$0x1] %vm486, %v726
        %747 = vst.msk [vmem:[#allocation3 + $0x47] sm:$0x1] %vm486, %v728
        %748 = vst.msk [vmem:[#allocation3 + $0x57] sm:$0x1] %vm486, %v730
        %749 = vst.msk [vmem:[#allocation3 + $0x67] sm:$0x1] %vm486, %v732
        %750 = vst.msk [vmem:[#allocation3 + $0x77] sm:$0x1] %vm486, %v734
        %v752 = vcombine.high %v426, %v426
        %v754 = vunpack.c.l.s4 1966171168
        %v755 = vunpack.c.0.s8 %v754
        %v756 = vlaneseq
        %v757 = vshrl.u32 %v756, 7
        %v758 = vsub.s32 %v755, %v757
        %v759 = vrot.slane %v426, %v758
        %v761 = vunpack.c.l.s4 1966171168
        %v762 = vunpack.c.0.s8 %v761
        %v763 = vlaneseq
        %v764 = vshrl.u32 %v763, 7
        %v765 = vsub.s32 %v762, %v764
        %v766 = vrot.slane %v752, %v765
        %v767 = vcombine.high %v759, %v759
        %v768 = vcombine.high %v766, %v766
        %v770 = vunpack.c.l.s4 1966171168
        %v771 = vunpack.c.0.s8 %v770
        %v772 = vlaneseq
        %v773 = vshrl.u32 %v772, 7
        %v774 = vsub.s32 %v771, %v773
        %v775 = vrot.slane %v759, %v774
        %v777 = vunpack.c.l.s4 1966171168
        %v778 = vunpack.c.0.s8 %v777
        %v779 = vlaneseq
        %v780 = vshrl.u32 %v779, 7
        %v781 = vsub.s32 %v778, %v780
        %v782 = vrot.slane %v766, %v781
        %v784 = vunpack.c.l.s4 1966171168
        %v785 = vunpack.c.0.s8 %v784
        %v786 = vlaneseq
        %v787 = vshrl.u32 %v786, 7
        %v788 = vsub.s32 %v785, %v787
        %v789 = vrot.slane %v767, %v788
        %v791 = vunpack.c.l.s4 1966171168
        %v792 = vunpack.c.0.s8 %v791
        %v793 = vlaneseq
        %v794 = vshrl.u32 %v793, 7
        %v795 = vsub.s32 %v792, %v794
        %v796 = vrot.slane %v768, %v795
        %v797 = vcombine.high %v775, %v775
        %v798 = vcombine.high %v782, %v782
        %v799 = vcombine.high %v789, %v789
        %v800 = vcombine.high %v796, %v796
        %809 = vst.msk [vmem:[#allocation3 + $0x8] sm:$0x1] %vm486, %v775
        %810 = vst.msk [vmem:[#allocation3 + $0x18] sm:$0x1] %vm486, %v789
        %811 = vst.msk [vmem:[#allocation3 + $0x28] sm:$0x1] %vm486, %v797
        %812 = vst.msk [vmem:[#allocation3 + $0x38] sm:$0x1] %vm486, %v799
        %813 = vst.msk [vmem:[#allocation3 + $0x48] sm:$0x1] %vm486, %v782
        %814 = vst.msk [vmem:[#allocation3 + $0x58] sm:$0x1] %vm486, %v796
        %815 = vst.msk [vmem:[#allocation3 + $0x68] sm:$0x1] %vm486, %v798
        %816 = vst.msk [vmem:[#allocation3 + $0x78] sm:$0x1] %vm486, %v800
        %v817 = vlaneseq
        %v818 = vshrl.u32 %v817, 7
        %v819 = vsub.s32 0, %v818
        %v820 = vrot.slane %v775, %v819
        %v821 = vlaneseq
        %v822 = vshrl.u32 %v821, 7
        %v823 = vsub.s32 0, %v822
        %v824 = vrot.slane %v789, %v823
        %v825 = vlaneseq
        %v826 = vshrl.u32 %v825, 7
        %v827 = vsub.s32 0, %v826
        %v828 = vrot.slane %v797, %v827
        %v829 = vlaneseq
        %v830 = vshrl.u32 %v829, 7
        %v831 = vsub.s32 0, %v830
        %v832 = vrot.slane %v799, %v831
        %v833 = vlaneseq
        %v834 = vshrl.u32 %v833, 7
        %v835 = vsub.s32 0, %v834
        %v836 = vrot.slane %v782, %v835
        %v837 = vlaneseq
        %v838 = vshrl.u32 %v837, 7
        %v839 = vsub.s32 0, %v838
        %v840 = vrot.slane %v796, %v839
        %v841 = vlaneseq
        %v842 = vshrl.u32 %v841, 7
        %v843 = vsub.s32 0, %v842
        %v844 = vrot.slane %v798, %v843
        %v845 = vlaneseq
        %v846 = vshrl.u32 %v845, 7
        %v847 = vsub.s32 0, %v846
        %v848 = vrot.slane %v800, %v847
        %849 = vrot.lane.b32.xlu0 %v820, 112
        %v850 = vpop.permute.xlu0 %849
        %851 = vrot.lane.b32.xlu0 %v824, 112
        %v852 = vpop.permute.xlu0 %851
        %853 = vrot.lane.b32.xlu0 %v828, 112
        %v854 = vpop.permute.xlu0 %853
        %855 = vrot.lane.b32.xlu0 %v832, 112
        %v856 = vpop.permute.xlu0 %855
        %857 = vrot.lane.b32.xlu0 %v836, 112
        %v858 = vpop.permute.xlu0 %857
        %859 = vrot.lane.b32.xlu0 %v840, 112
        %v860 = vpop.permute.xlu0 %859
        %861 = vrot.lane.b32.xlu0 %v844, 112
        %v862 = vpop.permute.xlu0 %861
        %863 = vrot.lane.b32.xlu0 %v848, 112
        %v864 = vpop.permute.xlu0 %863
        %873 = vst.msk [vmem:[#allocation3 + $0x9] sm:$0x1] %vm486, %v850
        %874 = vst.msk [vmem:[#allocation3 + $0x19] sm:$0x1] %vm486, %v852
        %875 = vst.msk [vmem:[#allocation3 + $0x29] sm:$0x1] %vm486, %v854
        %876 = vst.msk [vmem:[#allocation3 + $0x39] sm:$0x1] %vm486, %v856
        %877 = vst.msk [vmem:[#allocation3 + $0x49] sm:$0x1] %vm486, %v858
        %878 = vst.msk [vmem:[#allocation3 + $0x59] sm:$0x1] %vm486, %v860
        %879 = vst.msk [vmem:[#allocation3 + $0x69] sm:$0x1] %vm486, %v862
        %880 = vst.msk [vmem:[#allocation3 + $0x79] sm:$0x1] %vm486, %v864
        %881 = vrot.lane.b32.xlu0 %v820, 96
        %v882 = vpop.permute.xlu0 %881
        %883 = vrot.lane.b32.xlu0 %v824, 96
        %v884 = vpop.permute.xlu0 %883
        %885 = vrot.lane.b32.xlu0 %v828, 96
        %v886 = vpop.permute.xlu0 %885
        %887 = vrot.lane.b32.xlu0 %v832, 96
        %v888 = vpop.permute.xlu0 %887
        %889 = vrot.lane.b32.xlu0 %v836, 96
        %v890 = vpop.permute.xlu0 %889
        %891 = vrot.lane.b32.xlu0 %v840, 96
        %v892 = vpop.permute.xlu0 %891
        %893 = vrot.lane.b32.xlu0 %v844, 96
        %v894 = vpop.permute.xlu0 %893
        %895 = vrot.lane.b32.xlu0 %v848, 96
        %v896 = vpop.permute.xlu0 %895
        %905 = vst.msk [vmem:[#allocation3 + $0xa] sm:$0x1] %vm486, %v882
        %906 = vst.msk [vmem:[#allocation3 + $0x1a] sm:$0x1] %vm486, %v884
        %907 = vst.msk [vmem:[#allocation3 + $0x2a] sm:$0x1] %vm486, %v886
        %908 = vst.msk [vmem:[#allocation3 + $0x3a] sm:$0x1] %vm486, %v888
        %909 = vst.msk [vmem:[#allocation3 + $0x4a] sm:$0x1] %vm486, %v890
        %910 = vst.msk [vmem:[#allocation3 + $0x5a] sm:$0x1] %vm486, %v892
        %911 = vst.msk [vmem:[#allocation3 + $0x6a] sm:$0x1] %vm486, %v894
        %912 = vst.msk [vmem:[#allocation3 + $0x7a] sm:$0x1] %vm486, %v896
        %913 = vrot.lane.b32.xlu0 %v820, 80
        %v914 = vpop.permute.xlu0 %913
        %915 = vrot.lane.b32.xlu0 %v824, 80
        %v916 = vpop.permute.xlu0 %915
        %917 = vrot.lane.b32.xlu0 %v828, 80
        %v918 = vpop.permute.xlu0 %917
        %919 = vrot.lane.b32.xlu0 %v832, 80
        %v920 = vpop.permute.xlu0 %919
        %921 = vrot.lane.b32.xlu0 %v836, 80
        %v922 = vpop.permute.xlu0 %921
        %923 = vrot.lane.b32.xlu0 %v840, 80
        %v924 = vpop.permute.xlu0 %923
        %925 = vrot.lane.b32.xlu0 %v844, 80
        %v926 = vpop.permute.xlu0 %925
        %927 = vrot.lane.b32.xlu0 %v848, 80
        %v928 = vpop.permute.xlu0 %927
        %937 = vst.msk [vmem:[#allocation3 + $0xb] sm:$0x1] %vm486, %v914
        %938 = vst.msk [vmem:[#allocation3 + $0x1b] sm:$0x1] %vm486, %v916
        %939 = vst.msk [vmem:[#allocation3 + $0x2b] sm:$0x1] %vm486, %v918
        %940 = vst.msk [vmem:[#allocation3 + $0x3b] sm:$0x1] %vm486, %v920
        %941 = vst.msk [vmem:[#allocation3 + $0x4b] sm:$0x1] %vm486, %v922
        %942 = vst.msk [vmem:[#allocation3 + $0x5b] sm:$0x1] %vm486, %v924
        %943 = vst.msk [vmem:[#allocation3 + $0x6b] sm:$0x1] %vm486, %v926
        %944 = vst.msk [vmem:[#allocation3 + $0x7b] sm:$0x1] %vm486, %v928
        %945 = vrot.lane.b32.xlu0 %v820, 64
        %v946 = vpop.permute.xlu0 %945
        %947 = vrot.lane.b32.xlu0 %v824, 64
        %v948 = vpop.permute.xlu0 %947
        %949 = vrot.lane.b32.xlu0 %v828, 64
        %v950 = vpop.permute.xlu0 %949
        %951 = vrot.lane.b32.xlu0 %v832, 64
        %v952 = vpop.permute.xlu0 %951
        %953 = vrot.lane.b32.xlu0 %v836, 64
        %v954 = vpop.permute.xlu0 %953
        %955 = vrot.lane.b32.xlu0 %v840, 64
        %v956 = vpop.permute.xlu0 %955
        %957 = vrot.lane.b32.xlu0 %v844, 64
        %v958 = vpop.permute.xlu0 %957
        %959 = vrot.lane.b32.xlu0 %v848, 64
        %v960 = vpop.permute.xlu0 %959
        %969 = vst.msk [vmem:[#allocation3 + $0xc] sm:$0x1] %vm486, %v946
        %970 = vst.msk [vmem:[#allocation3 + $0x1c] sm:$0x1] %vm486, %v948
        %971 = vst.msk [vmem:[#allocation3 + $0x2c] sm:$0x1] %vm486, %v950
        %972 = vst.msk [vmem:[#allocation3 + $0x3c] sm:$0x1] %vm486, %v952
        %973 = vst.msk [vmem:[#allocation3 + $0x4c] sm:$0x1] %vm486, %v954
        %974 = vst.msk [vmem:[#allocation3 + $0x5c] sm:$0x1] %vm486, %v956
        %975 = vst.msk [vmem:[#allocation3 + $0x6c] sm:$0x1] %vm486, %v958
        %976 = vst.msk [vmem:[#allocation3 + $0x7c] sm:$0x1] %vm486, %v960
        %977 = vrot.lane.b32.xlu0 %v820, 48
        %v978 = vpop.permute.xlu0 %977
        %979 = vrot.lane.b32.xlu0 %v824, 48
        %v980 = vpop.permute.xlu0 %979
        %981 = vrot.lane.b32.xlu0 %v828, 48
        %v982 = vpop.permute.xlu0 %981
        %983 = vrot.lane.b32.xlu0 %v832, 48
        %v984 = vpop.permute.xlu0 %983
        %985 = vrot.lane.b32.xlu0 %v836, 48
        %v986 = vpop.permute.xlu0 %985
        %987 = vrot.lane.b32.xlu0 %v840, 48
        %v988 = vpop.permute.xlu0 %987
        %989 = vrot.lane.b32.xlu0 %v844, 48
        %v990 = vpop.permute.xlu0 %989
        %991 = vrot.lane.b32.xlu0 %v848, 48
        %v992 = vpop.permute.xlu0 %991
        %1001 = vst.msk [vmem:[#allocation3 + $0xd] sm:$0x1] %vm486, %v978
        %1002 = vst.msk [vmem:[#allocation3 + $0x1d] sm:$0x1] %vm486, %v980
        %1003 = vst.msk [vmem:[#allocation3 + $0x2d] sm:$0x1] %vm486, %v982
        %1004 = vst.msk [vmem:[#allocation3 + $0x3d] sm:$0x1] %vm486, %v984
        %1005 = vst.msk [vmem:[#allocation3 + $0x4d] sm:$0x1] %vm486, %v986
        %1006 = vst.msk [vmem:[#allocation3 + $0x5d] sm:$0x1] %vm486, %v988
        %1007 = vst.msk [vmem:[#allocation3 + $0x6d] sm:$0x1] %vm486, %v990
        %1008 = vst.msk [vmem:[#allocation3 + $0x7d] sm:$0x1] %vm486, %v992
        %1009 = vrot.lane.b32.xlu0 %v820, 32
        %v1010 = vpop.permute.xlu0 %1009
        %1011 = vrot.lane.b32.xlu0 %v824, 32
        %v1012 = vpop.permute.xlu0 %1011
        %1013 = vrot.lane.b32.xlu0 %v828, 32
        %v1014 = vpop.permute.xlu0 %1013
        %1015 = vrot.lane.b32.xlu0 %v832, 32
        %v1016 = vpop.permute.xlu0 %1015
        %1017 = vrot.lane.b32.xlu0 %v836, 32
        %v1018 = vpop.permute.xlu0 %1017
        %1019 = vrot.lane.b32.xlu0 %v840, 32
        %v1020 = vpop.permute.xlu0 %1019
        %1021 = vrot.lane.b32.xlu0 %v844, 32
        %v1022 = vpop.permute.xlu0 %1021
        %1023 = vrot.lane.b32.xlu0 %v848, 32
        %v1024 = vpop.permute.xlu0 %1023
        %1033 = vst.msk [vmem:[#allocation3 + $0xe] sm:$0x1] %vm486, %v1010
        %1034 = vst.msk [vmem:[#allocation3 + $0x1e] sm:$0x1] %vm486, %v1012
        %1035 = vst.msk [vmem:[#allocation3 + $0x2e] sm:$0x1] %vm486, %v1014
        %1036 = vst.msk [vmem:[#allocation3 + $0x3e] sm:$0x1] %vm486, %v1016
        %1037 = vst.msk [vmem:[#allocation3 + $0x4e] sm:$0x1] %vm486, %v1018
        %1038 = vst.msk [vmem:[#allocation3 + $0x5e] sm:$0x1] %vm486, %v1020
        %1039 = vst.msk [vmem:[#allocation3 + $0x6e] sm:$0x1] %vm486, %v1022
        %1040 = vst.msk [vmem:[#allocation3 + $0x7e] sm:$0x1] %vm486, %v1024
        %1041 = vrot.lane.b32.xlu0 %v820, 16
        %v1042 = vpop.permute.xlu0 %1041
        %1043 = vrot.lane.b32.xlu0 %v824, 16
        %v1044 = vpop.permute.xlu0 %1043
        %1045 = vrot.lane.b32.xlu0 %v828, 16
        %v1046 = vpop.permute.xlu0 %1045
        %1047 = vrot.lane.b32.xlu0 %v832, 16
        %v1048 = vpop.permute.xlu0 %1047
        %1049 = vrot.lane.b32.xlu0 %v836, 16
        %v1050 = vpop.permute.xlu0 %1049
        %1051 = vrot.lane.b32.xlu0 %v840, 16
        %v1052 = vpop.permute.xlu0 %1051
        %1053 = vrot.lane.b32.xlu0 %v844, 16
        %v1054 = vpop.permute.xlu0 %1053
        %1055 = vrot.lane.b32.xlu0 %v848, 16
        %v1056 = vpop.permute.xlu0 %1055
        %1065 = vst.msk [vmem:[#allocation3 + $0xf] sm:$0x1] %vm486, %v1042
        %1066 = vst.msk [vmem:[#allocation3 + $0x1f] sm:$0x1] %vm486, %v1044
        %1067 = vst.msk [vmem:[#allocation3 + $0x2f] sm:$0x1] %vm486, %v1046
        %1068 = vst.msk [vmem:[#allocation3 + $0x3f] sm:$0x1] %vm486, %v1048
        %1069 = vst.msk [vmem:[#allocation3 + $0x4f] sm:$0x1] %vm486, %v1050
        %1070 = vst.msk [vmem:[#allocation3 + $0x5f] sm:$0x1] %vm486, %v1052
        %1071 = vst.msk [vmem:[#allocation3 + $0x6f] sm:$0x1] %vm486, %v1054
        %1072 = vst.msk [vmem:[#allocation3 + $0x7f] sm:$0x1] %vm486, %v1056
        %v1073 = vlaneseq
        %v1074 = vshrl.u32 %v1073, 7
        %v1075 = vadd.s32 %v1074, 8
        %v1076 = vmul.u32 %v1074, 2
        %v1077 = vmul.u32 %v1075, 2
        %vm1078 = vcmp.eq.s32.totalorder %v175, %v1076
        %vm1079 = vcmp.eq.s32.totalorder %v175, %v1077
        %v1080 = vsel %vm1078, 1, 0
        %v1081 = vsel %vm1079, 1, 0
        %v1082 = vcvt.s32.f32 %v1080
        %v1083 = vcvt.s32.f32 %v1081
        %v1084 = vadd.s32 %v1076, 1
        %v1085 = vadd.s32 %v1077, 1
        %vm1086 = vcmp.eq.s32.totalorder %v175, %v1084
        %vm1087 = vcmp.eq.s32.totalorder %v175, %v1085
        %v1088 = vsel %vm1086, 1, 0
        %v1089 = vsel %vm1087, 1, 0
        %v1090 = vcvt.s32.f32 %v1088
        %v1091 = vcvt.s32.f32 %v1089
        %v1092 = vld [vmem:[#allocation3] sm:$0xff]
        %v1093 = vld [vmem:[#allocation3 + $0x8] sm:$0xff]
        %v1094 = vld [vmem:[#allocation3 + $0x10] sm:$0xff]
        %v1095 = vld [vmem:[#allocation3 + $0x18] sm:$0xff]
        %s1096 = scalar_lea.vmem [#allocation3], 32
        %v1097 = vld [vmem:[%s1096] sm:$0xff]
        %v1098 = vld [vmem:[%s1096 + $0x8] sm:$0xff]
        %v1099 = vld [vmem:[%s1096 + $0x10] sm:$0xff]
        %v1100 = vld [vmem:[%s1096 + $0x18] sm:$0xff]
        %v1102 = vsel %vm240, %v1097, 0
        %v1105 = vsel %vm240, %v1098, 0
        %v1108 = vsel %vm240, %v1099, 0
        %v1111 = vsel %vm240, %v1100, 0
        %1113 = vmatprep.subr.mxu0 0.0
        %1114 = vmatpush1.msra.mxu0 %v1090
        %1115 = vmatprep.subr.mxu0 0.0
        %1116 = vmatpush1.msra.mxu0 %v1091
        %1117 = vmatprep.subr.mxu0 0.0
        %1118 = vmatpush1.msra.mxu0 0.0
        %1119 = vmatprep.subr.mxu0 0.0
        %1120 = vmatpush1.msra.mxu0 0.0
        %1121 = vmatprep.subr.mxu0 0.0
        %1122 = vmatpush1.msra.mxu0 0.0
        %1123 = vmatprep.subr.mxu0 0.0
        %1124 = vmatpush1.msra.mxu0 0.0
        %1125 = vmatprep.subr.mxu0 0.0
        %1126 = vmatpush1.msra.mxu0 0.0
        %1127 = vmatprep.subr.mxu0 0.0
        %1128 = vmatpush1.msra.mxu0 0.0
        %1129 = vmatprep.subr.mxu0 0.0
        %1130 = vmatpush1.msra.mxu0 0.0
        %1131 = vmatprep.subr.mxu0 0.0
        %1132 = vmatpush1.msra.mxu0 0.0
        %1133 = vmatprep.subr.mxu0 0.0
        %1134 = vmatpush1.msra.mxu0 0.0
        %1135 = vmatprep.subr.mxu0 0.0
        %1136 = vmatpush1.msra.mxu0 0.0
        %1137 = vmatprep.subr.mxu0 0.0
        %1138 = vmatpush1.msra.mxu0 0.0
        %1139 = vmatprep.subr.mxu0 0.0
        %1140 = vmatpush1.msra.mxu0 0.0
        %1141 = vmatprep.subr.mxu0 0.0
        %1142 = vmatpush1.msra.mxu0 0.0
        %1143 = vmatprep.subr.mxu0 0.0
        %1144 = vmatpush1.msra.mxu0 0.0
        %1145 = vmatprep.subr.mxu0 0.0
        %1146 = vmatpush1.msra.mxu0 0.0
        %1147 = vmatprep.subr.mxu0 0.0
        %1148 = vmatpush1.msra.mxu0 0.0
        %1149 = vmatprep.subr.mxu0 0.0
        %1150 = vmatpush1.msra.mxu0 0.0
        %1151 = vmatprep.subr.mxu0 0.0
        %1152 = vmatpush1.msra.mxu0 0.0
        %1153 = vmatprep.subr.mxu0 0.0
        %1154 = vmatpush1.msra.mxu0 0.0
        %1155 = vmatprep.subr.mxu0 0.0
        %1156 = vmatpush1.msra.mxu0 0.0
        %1157 = vmatprep.subr.mxu0 0.0
        %1158 = vmatpush1.msra.mxu0 0.0
        %1159 = vmatprep.subr.mxu0 0.0
        %1160 = vmatpush1.msra.mxu0 0.0
        %1161 = vmatprep.subr.mxu0 0.0
        %1162 = vmatpush1.msra.mxu0 0.0
        %1163 = vmatprep.subr.mxu0 0.0
        %1164 = vmatpush1.msra.mxu0 0.0
        %1165 = vmatprep.subr.mxu0 0.0
        %1166 = vmatpush1.msra.mxu0 0.0
        %1167 = vmatprep.subr.mxu0 0.0
        %1168 = vmatpush1.msra.mxu0 0.0
        %1169 = vmatprep.subr.mxu0 0.0
        %1170 = vmatpush1.msra.mxu0 0.0
        %1171 = vmatprep.subr.mxu0 0.0
        %1172 = vmatpush1.msra.mxu0 0.0
        %1173 = vmatprep.subr.mxu0 0.0
        %1174 = vmatpush1.msra.mxu0 0.0
        %1175 = vmatprep.subr.mxu0 0.0
        %1176 = vmatpush1.msra.mxu0 0.0
        %1177 = vmatprep.mubr.f32.mxu0 0.0
        %1178 = vmatmul.mubr.f32.gmra.mrb[0].mxu0 %v1102
        %v1179 = vpop.f32.mrb[0].mxu0
        %v1180 = vadd.f32 0.0, %v1179
        %v1181 = vpop.f32.mrb[0].mxu0
        %1182 = vmatprep.mubr.f32.mxu0 0.0
        %1183 = vmatmul.mubr.f32.gmra.mrb[0].mxu0 %v1105
        %v1184 = vpop.f32.mrb[0].mxu0
        %v1185 = vadd.f32 0.0, %v1184
        %v1186 = vpop.f32.mrb[0].mxu0
        %1187 = vmatprep.mubr.f32.mxu0 0.0
        %1188 = vmatmul.mubr.f32.gmra.mrb[0].mxu0 %v1108
        %v1189 = vpop.f32.mrb[0].mxu0
        %v1190 = vadd.f32 0.0, %v1189
        %v1191 = vpop.f32.mrb[0].mxu0
        %1192 = vmatprep.mubr.f32.mxu0 0.0
        %1193 = vmatmul.mubr.f32.gmra.mrb[0].mxu0 %v1111
        %v1194 = vpop.f32.mrb[0].mxu0
        %v1195 = vadd.f32 0.0, %v1194
        %v1196 = vpop.f32.mrb[0].mxu0
        %1197 = vdwg.mxu0
        %v1199 = vsel %vm240, %v1092, 0
        %v1202 = vsel %vm240, %v1093, 0
        %v1205 = vsel %vm240, %v1094, 0
        %v1208 = vsel %vm240, %v1095, 0
        %1210 = vmatprep.subr.mxu0 0.0
        %1211 = vmatpush1.msra.mxu0 %v1082
        %1212 = vmatprep.subr.mxu0 0.0
        %1213 = vmatpush1.msra.mxu0 %v1083
        %1214 = vmatprep.subr.mxu0 0.0
        %1215 = vmatpush1.msra.mxu0 0.0
        %1216 = vmatprep.subr.mxu0 0.0
        %1217 = vmatpush1.msra.mxu0 0.0
        %1218 = vmatprep.subr.mxu0 0.0
        %1219 = vmatpush1.msra.mxu0 0.0
        %1220 = vmatprep.subr.mxu0 0.0
        %1221 = vmatpush1.msra.mxu0 0.0
        %1222 = vmatprep.subr.mxu0 0.0
        %1223 = vmatpush1.msra.mxu0 0.0
        %1224 = vmatprep.subr.mxu0 0.0
        %1225 = vmatpush1.msra.mxu0 0.0
        %1226 = vmatprep.subr.mxu0 0.0
        %1227 = vmatpush1.msra.mxu0 0.0
        %1228 = vmatprep.subr.mxu0 0.0
        %1229 = vmatpush1.msra.mxu0 0.0
        %1230 = vmatprep.subr.mxu0 0.0
        %1231 = vmatpush1.msra.mxu0 0.0
        %1232 = vmatprep.subr.mxu0 0.0
        %1233 = vmatpush1.msra.mxu0 0.0
        %1234 = vmatprep.subr.mxu0 0.0
        %1235 = vmatpush1.msra.mxu0 0.0
        %1236 = vmatprep.subr.mxu0 0.0
        %1237 = vmatpush1.msra.mxu0 0.0
        %1238 = vmatprep.subr.mxu0 0.0
        %1239 = vmatpush1.msra.mxu0 0.0
        %1240 = vmatprep.subr.mxu0 0.0
        %1241 = vmatpush1.msra.mxu0 0.0
        %1242 = vmatprep.subr.mxu0 0.0
        %1243 = vmatpush1.msra.mxu0 0.0
        %1244 = vmatprep.subr.mxu0 0.0
        %1245 = vmatpush1.msra.mxu0 0.0
        %1246 = vmatprep.subr.mxu0 0.0
        %1247 = vmatpush1.msra.mxu0 0.0
        %1248 = vmatprep.subr.mxu0 0.0
        %1249 = vmatpush1.msra.mxu0 0.0
        %1250 = vmatprep.subr.mxu0 0.0
        %1251 = vmatpush1.msra.mxu0 0.0
        %1252 = vmatprep.subr.mxu0 0.0
        %1253 = vmatpush1.msra.mxu0 0.0
        %1254 = vmatprep.subr.mxu0 0.0
        %1255 = vmatpush1.msra.mxu0 0.0
        %1256 = vmatprep.subr.mxu0 0.0
        %1257 = vmatpush1.msra.mxu0 0.0
        %1258 = vmatprep.subr.mxu0 0.0
        %1259 = vmatpush1.msra.mxu0 0.0
        %1260 = vmatprep.subr.mxu0 0.0
        %1261 = vmatpush1.msra.mxu0 0.0
        %1262 = vmatprep.subr.mxu0 0.0
        %1263 = vmatpush1.msra.mxu0 0.0
        %1264 = vmatprep.subr.mxu0 0.0
        %1265 = vmatpush1.msra.mxu0 0.0
        %1266 = vmatprep.subr.mxu0 0.0
        %1267 = vmatpush1.msra.mxu0 0.0
        %1268 = vmatprep.subr.mxu0 0.0
        %1269 = vmatpush1.msra.mxu0 0.0
        %1270 = vmatprep.subr.mxu0 0.0
        %1271 = vmatpush1.msra.mxu0 0.0
        %1272 = vmatprep.subr.mxu0 0.0
        %1273 = vmatpush1.msra.mxu0 0.0
        %1274 = vmatprep.mubr.f32.mxu0 0.0
        %1275 = vmatmul.mubr.f32.gmra.mrb[0].mxu0 %v1199
        %v1276 = vpop.f32.mrb[0].mxu0
        %v1277 = vadd.f32 %v1180, %v1276
        %v1278 = vpop.f32.mrb[0].mxu0
        %1279 = vmatprep.mubr.f32.mxu0 0.0
        %1280 = vmatmul.mubr.f32.gmra.mrb[0].mxu0 %v1202
        %v1281 = vpop.f32.mrb[0].mxu0
        %v1282 = vadd.f32 %v1185, %v1281
        %v1283 = vpop.f32.mrb[0].mxu0
        %1284 = vmatprep.mubr.f32.mxu0 0.0
        %1285 = vmatmul.mubr.f32.gmra.mrb[0].mxu0 %v1205
        %v1286 = vpop.f32.mrb[0].mxu0
        %v1287 = vadd.f32 %v1190, %v1286
        %v1288 = vpop.f32.mrb[0].mxu0
        %1289 = vmatprep.mubr.f32.mxu0 0.0
        %1290 = vmatmul.mubr.f32.gmra.mrb[0].mxu0 %v1208
        %v1291 = vpop.f32.mrb[0].mxu0
        %v1292 = vadd.f32 %v1195, %v1291
        %v1293 = vpop.f32.mrb[0].mxu0
        %1294 = vdwg.mxu0
        %vm1295 = vcmask 261120
        %1296 = vst.msk [vmem:[%s172] sm:$0xff] %vm1295, %v1277
        %1297 = vst.msk [vmem:[%s172 + $0x8] sm:$0xff] %vm1295, %v1282
        %1298 = vst.msk [vmem:[%s172 + $0x10] sm:$0xff] %vm1295, %v1287
        %1299 = vst.msk [vmem:[%s172 + $0x18] sm:$0xff] %vm1295, %v1292
        %s1300 = scalar_lea.vmem [#allocation3], 64
        %v1301 = vld [vmem:[%s1300] sm:$0xff]
        %v1302 = vld [vmem:[%s1300 + $0x8] sm:$0xff]
        %v1303 = vld [vmem:[%s1300 + $0x10] sm:$0xff]
        %v1304 = vld [vmem:[%s1300 + $0x18] sm:$0xff]
        %s1305 = scalar_lea.vmem [#allocation3], 96
        %v1306 = vld [vmem:[%s1305] sm:$0xff]
        %v1307 = vld [vmem:[%s1305 + $0x8] sm:$0xff]
        %v1308 = vld [vmem:[%s1305 + $0x10] sm:$0xff]
        %v1309 = vld [vmem:[%s1305 + $0x18] sm:$0xff]
        %v1311 = vsel %vm240, %v1306, 0
        %v1314 = vsel %vm240, %v1307, 0
        %v1317 = vsel %vm240, %v1308, 0
        %v1320 = vsel %vm240, %v1309, 0
        %1322 = vmatprep.subr.mxu0 0.0
        %1323 = vmatpush1.msra.mxu0 %v1090
        %1324 = vmatprep.subr.mxu0 0.0
        %1325 = vmatpush1.msra.mxu0 %v1091
        %1326 = vmatprep.subr.mxu0 0.0
        %1327 = vmatpush1.msra.mxu0 0.0
        %1328 = vmatprep.subr.mxu0 0.0
        %1329 = vmatpush1.msra.mxu0 0.0
        %1330 = vmatprep.subr.mxu0 0.0
        %1331 = vmatpush1.msra.mxu0 0.0
        %1332 = vmatprep.subr.mxu0 0.0
        %1333 = vmatpush1.msra.mxu0 0.0
        %1334 = vmatprep.subr.mxu0 0.0
        %1335 = vmatpush1.msra.mxu0 0.0
        %1336 = vmatprep.subr.mxu0 0.0
        %1337 = vmatpush1.msra.mxu0 0.0
        %1338 = vmatprep.subr.mxu0 0.0
        %1339 = vmatpush1.msra.mxu0 0.0
        %1340 = vmatprep.subr.mxu0 0.0
        %1341 = vmatpush1.msra.mxu0 0.0
        %1342 = vmatprep.subr.mxu0 0.0
        %1343 = vmatpush1.msra.mxu0 0.0
        %1344 = vmatprep.subr.mxu0 0.0
        %1345 = vmatpush1.msra.mxu0 0.0
        %1346 = vmatprep.subr.mxu0 0.0
        %1347 = vmatpush1.msra.mxu0 0.0
        %1348 = vmatprep.subr.mxu0 0.0
        %1349 = vmatpush1.msra.mxu0 0.0
        %1350 = vmatprep.subr.mxu0 0.0
        %1351 = vmatpush1.msra.mxu0 0.0
        %1352 = vmatprep.subr.mxu0 0.0
        %1353 = vmatpush1.msra.mxu0 0.0
        %1354 = vmatprep.subr.mxu0 0.0
        %1355 = vmatpush1.msra.mxu0 0.0
        %1356 = vmatprep.subr.mxu0 0.0
        %1357 = vmatpush1.msra.mxu0 0.0
        %1358 = vmatprep.subr.mxu0 0.0
        %1359 = vmatpush1.msra.mxu0 0.0
        %1360 = vmatprep.subr.mxu0 0.0
        %1361 = vmatpush1.msra.mxu0 0.0
        %1362 = vmatprep.subr.mxu0 0.0
        %1363 = vmatpush1.msra.mxu0 0.0
        %1364 = vmatprep.subr.mxu0 0.0
        %1365 = vmatpush1.msra.mxu0 0.0
        %1366 = vmatprep.subr.mxu0 0.0
        %1367 = vmatpush1.msra.mxu0 0.0
        %1368 = vmatprep.subr.mxu0 0.0
        %1369 = vmatpush1.msra.mxu0 0.0
        %1370 = vmatprep.subr.mxu0 0.0
        %1371 = vmatpush1.msra.mxu0 0.0
        %1372 = vmatprep.subr.mxu0 0.0
        %1373 = vmatpush1.msra.mxu0 0.0
        %1374 = vmatprep.subr.mxu0 0.0
        %1375 = vmatpush1.msra.mxu0 0.0
        %1376 = vmatprep.subr.mxu0 0.0
        %1377 = vmatpush1.msra.mxu0 0.0
        %1378 = vmatprep.subr.mxu0 0.0
        %1379 = vmatpush1.msra.mxu0 0.0
        %1380 = vmatprep.subr.mxu0 0.0
        %1381 = vmatpush1.msra.mxu0 0.0
        %1382 = vmatprep.subr.mxu0 0.0
        %1383 = vmatpush1.msra.mxu0 0.0
        %1384 = vmatprep.subr.mxu0 0.0
        %1385 = vmatpush1.msra.mxu0 0.0
        %1386 = vmatprep.mubr.f32.mxu0 0.0
        %1387 = vmatmul.mubr.f32.gmra.mrb[0].mxu0 %v1311
        %v1388 = vpop.f32.mrb[0].mxu0
        %v1389 = vadd.f32 0.0, %v1388
        %v1390 = vpop.f32.mrb[0].mxu0
        %1391 = vmatprep.mubr.f32.mxu0 0.0
        %1392 = vmatmul.mubr.f32.gmra.mrb[0].mxu0 %v1314
        %v1393 = vpop.f32.mrb[0].mxu0
        %v1394 = vadd.f32 0.0, %v1393
        %v1395 = vpop.f32.mrb[0].mxu0
        %1396 = vmatprep.mubr.f32.mxu0 0.0
        %1397 = vmatmul.mubr.f32.gmra.mrb[0].mxu0 %v1317
        %v1398 = vpop.f32.mrb[0].mxu0
        %v1399 = vadd.f32 0.0, %v1398
        %v1400 = vpop.f32.mrb[0].mxu0
        %1401 = vmatprep.mubr.f32.mxu0 0.0
        %1402 = vmatmul.mubr.f32.gmra.mrb[0].mxu0 %v1320
        %v1403 = vpop.f32.mrb[0].mxu0
        %v1404 = vadd.f32 0.0, %v1403
        %v1405 = vpop.f32.mrb[0].mxu0
        %1406 = vdwg.mxu0
        %v1408 = vsel %vm240, %v1301, 0
        %v1411 = vsel %vm240, %v1302, 0
        %v1414 = vsel %vm240, %v1303, 0
        %v1417 = vsel %vm240, %v1304, 0
        %1419 = vmatprep.subr.mxu0 0.0
        %1420 = vmatpush1.msra.mxu0 %v1082
        %1421 = vmatprep.subr.mxu0 0.0
        %1422 = vmatpush1.msra.mxu0 %v1083
        %1423 = vmatprep.subr.mxu0 0.0
        %1424 = vmatpush1.msra.mxu0 0.0
        %1425 = vmatprep.subr.mxu0 0.0
        %1426 = vmatpush1.msra.mxu0 0.0
        %1427 = vmatprep.subr.mxu0 0.0
        %1428 = vmatpush1.msra.mxu0 0.0
        %1429 = vmatprep.subr.mxu0 0.0
        %1430 = vmatpush1.msra.mxu0 0.0
        %1431 = vmatprep.subr.mxu0 0.0
        %1432 = vmatpush1.msra.mxu0 0.0
        %1433 = vmatprep.subr.mxu0 0.0
        %1434 = vmatpush1.msra.mxu0 0.0
        %1435 = vmatprep.subr.mxu0 0.0
        %1436 = vmatpush1.msra.mxu0 0.0
        %1437 = vmatprep.subr.mxu0 0.0
        %1438 = vmatpush1.msra.mxu0 0.0
        %1439 = vmatprep.subr.mxu0 0.0
        %1440 = vmatpush1.msra.mxu0 0.0
        %1441 = vmatprep.subr.mxu0 0.0
        %1442 = vmatpush1.msra.mxu0 0.0
        %1443 = vmatprep.subr.mxu0 0.0
        %1444 = vmatpush1.msra.mxu0 0.0
        %1445 = vmatprep.subr.mxu0 0.0
        %1446 = vmatpush1.msra.mxu0 0.0
        %1447 = vmatprep.subr.mxu0 0.0
        %1448 = vmatpush1.msra.mxu0 0.0
        %1449 = vmatprep.subr.mxu0 0.0
        %1450 = vmatpush1.msra.mxu0 0.0
        %1451 = vmatprep.subr.mxu0 0.0
        %1452 = vmatpush1.msra.mxu0 0.0
        %1453 = vmatprep.subr.mxu0 0.0
        %1454 = vmatpush1.msra.mxu0 0.0
        %1455 = vmatprep.subr.mxu0 0.0
        %1456 = vmatpush1.msra.mxu0 0.0
        %1457 = vmatprep.subr.mxu0 0.0
        %1458 = vmatpush1.msra.mxu0 0.0
        %1459 = vmatprep.subr.mxu0 0.0
        %1460 = vmatpush1.msra.mxu0 0.0
        %1461 = vmatprep.subr.mxu0 0.0
        %1462 = vmatpush1.msra.mxu0 0.0
        %1463 = vmatprep.subr.mxu0 0.0
        %1464 = vmatpush1.msra.mxu0 0.0
        %1465 = vmatprep.subr.mxu0 0.0
        %1466 = vmatpush1.msra.mxu0 0.0
        %1467 = vmatprep.subr.mxu0 0.0
        %1468 = vmatpush1.msra.mxu0 0.0
        %1469 = vmatprep.subr.mxu0 0.0
        %1470 = vmatpush1.msra.mxu0 0.0
        %1471 = vmatprep.subr.mxu0 0.0
        %1472 = vmatpush1.msra.mxu0 0.0
        %1473 = vmatprep.subr.mxu0 0.0
        %1474 = vmatpush1.msra.mxu0 0.0
        %1475 = vmatprep.subr.mxu0 0.0
        %1476 = vmatpush1.msra.mxu0 0.0
        %1477 = vmatprep.subr.mxu0 0.0
        %1478 = vmatpush1.msra.mxu0 0.0
        %1479 = vmatprep.subr.mxu0 0.0
        %1480 = vmatpush1.msra.mxu0 0.0
        %1481 = vmatprep.subr.mxu0 0.0
        %1482 = vmatpush1.msra.mxu0 0.0
        %1483 = vmatprep.mubr.f32.mxu0 0.0
        %1484 = vmatmul.mubr.f32.gmra.mrb[0].mxu0 %v1408
        %v1485 = vpop.f32.mrb[0].mxu0
        %v1486 = vadd.f32 %v1389, %v1485
        %v1487 = vpop.f32.mrb[0].mxu0
        %1488 = vmatprep.mubr.f32.mxu0 0.0
        %1489 = vmatmul.mubr.f32.gmra.mrb[0].mxu0 %v1411
        %v1490 = vpop.f32.mrb[0].mxu0
        %v1491 = vadd.f32 %v1394, %v1490
        %v1492 = vpop.f32.mrb[0].mxu0
        %1493 = vmatprep.mubr.f32.mxu0 0.0
        %1494 = vmatmul.mubr.f32.gmra.mrb[0].mxu0 %v1414
        %v1495 = vpop.f32.mrb[0].mxu0
        %v1496 = vadd.f32 %v1399, %v1495
        %v1497 = vpop.f32.mrb[0].mxu0
        %1498 = vmatprep.mubr.f32.mxu0 0.0
        %1499 = vmatmul.mubr.f32.gmra.mrb[0].mxu0 %v1417
        %v1500 = vpop.f32.mrb[0].mxu0
        %v1501 = vadd.f32 %v1404, %v1500
        %v1502 = vpop.f32.mrb[0].mxu0
        %1503 = vdwg.mxu0
        %1508 = vrot.lane.b32.xlu0 %v1486, 32
        %v1509 = vpop.permute.xlu0 %1508
        %1510 = vrot.lane.b32.xlu0 %v1491, 32
        %v1511 = vpop.permute.xlu0 %1510
        %1512 = vrot.lane.b32.xlu0 %v1496, 32
        %v1513 = vpop.permute.xlu0 %1512
        %1514 = vrot.lane.b32.xlu0 %v1501, 32
        %v1515 = vpop.permute.xlu0 %1514
        %vm1520 = vcmask 523520
        %1521 = vst.msk [vmem:[%s172] sm:$0xff] %vm1520, %v1509
        %1522 = vst.msk [vmem:[%s172 + $0x8] sm:$0xff] %vm1520, %v1511
        %1523 = vst.msk [vmem:[%s172 + $0x10] sm:$0xff] %vm1520, %v1513
        %1524 = vst.msk [vmem:[%s172 + $0x18] sm:$0xff] %vm1520, %v1515
        %s1525 = sand.u32 %s75, 1
        %s1526 = scalar_lea.sflag [#allocation6], %s1525
        %s1527 = sand.u32 %s75, 1
        %s1528 = smul.addr %s1527, 32
        %s1529 = scalar_lea.vmem [#allocation9], %s1528
        // Predicated region
        $region37: #{tpu_custom_call.1} parent=27 // pred_check
          %p1530 = pneg %p85
        $region38: #{tpu_custom_call.1} parent=27 // pred_check_branch
          %1532 = sbr.rel (%p1530) target = $region40
        $region39: #{tpu_custom_call.1} parent=27 // pred_region
          %s1534 = ssub.s32 512, 512
          %1535 = vsyncadd %s1526, %s1534
          %s1536 = smul.addr %s20, 4
          %s1537 = smul.addr %s1536, 128
          %s1538 = scalar_lea.hbm %s2, %s1537
          %s1539 = sshll.u32 %s1529, 4
          %s1540 = int_to_ptr.vmem [resolvable:$true] %s1539
          %1545 = dma.vmem_to_hbm [thread:$0]  %s1540, 512, %s1538, %s1526, 128, 128, 8
        $region40: #{tpu_custom_call.1} parent=27 // pred_fallthru
          _
      $region28: #{tpu_custom_call.1} parent=5 // pred_fallthru
        _
      %p1546 = scmp.le.s32.totalorder 2, %s15
      // Predicated region
      $region41: #{tpu_custom_call.1} parent=5 // pred_check
        %p1547 = pneg %p1546
      $region42: #{tpu_custom_call.1} parent=5 // pred_check_branch
        %1549 = sbr.rel (%p1547) target = $region44
      $region43: #{tpu_custom_call.1} parent=5 // pred_region
        %s1550 = ssub.s32 %s15, 2
        // Predicated region
        $region45: #{tpu_custom_call.1} parent=43 // pred_check
          %p1551 = pneg %p91
        $region46: #{tpu_custom_call.1} parent=43 // pred_check_branch
          %1553 = sbr.rel (%p1551) target = $region48
        $region47: #{tpu_custom_call.1} parent=43 // pred_region
          %s1554 = sand.u32 %s76, 1
          %s1555 = scalar_lea.sflag [#allocation6], %s1554
          %s1556 = sand.u32 %s76, 1
          %s1557 = smul.addr %s1556, 32
          %s1558 = scalar_lea.vmem [#allocation9], %s1557
          %1559 = dma.done %s1555, 512
        $region48: #{tpu_custom_call.1} parent=43 // pred_fallthru
          _
      $region44: #{tpu_custom_call.1} parent=5 // pred_fallthru
        _
    $region6: #{tpu_custom_call.1} parent=1 // loop_footer
      %s19 = sadd.s32 1, %s15
    $region7: #{tpu_custom_call.1} parent=1 // loop_footer_branch
      %14 = sbr.rel target = $region3
    $region8: #{tpu_custom_call.1} parent=1 // loop_exit
      _
    %1560 = vsyncpa [#allocation5], 1
    %s1561 = scalar_lea.sflag [#allocation5], 1
    %1562 = vsyncpa %s1561, 1
    %1563 = vsyncpa [#allocation8], 1
    %1564 = vsyncpa [#allocation6], 1
    %s1565 = scalar_lea.sflag [#allocation6], 1
    %1566 = vsyncpa %s1565, 1

</llo_original>
